<compile_context>
chip_gen: v5e
topology: v5e:2x2
jax: 0.10.0
libtpu: 0.0.40
codegen_flags: <defaults>
</compile_context>

<pallas_src>
import functools

import numpy as np
import jax
import jax.numpy as jnp
from jax.experimental import pallas as pl
from jax.experimental.pallas import tpu as pltpu

_LANE = 128
_VMEM_LIMIT = 32 * 1024 * 1024        # explicit scoped-VMEM limit (all gens)
_VMEM_TILE_BUDGET = 24 * 1024 * 1024  # working-set target, leaves headroom


def _round_up(x, m):
    return (x + m - 1) // m * m


def _cdiv(a, b):
    return -(-a // b)


def _pick_m_tiling(M, per_row_bytes, fixed_bytes, *, target_tile=512,
                   split_threshold=256):
    """Return (padded_M, tile_m, grid_size).

    - tile rows are multiples of 16 (bf16 packs 16 sublanes) unless the block
      is the full (unpadded) M,
    - at least 2 'parallel' grid steps whenever M >= split_threshold (shards
      across v7x's two TensorCores and lets BlockSpec pipelining overlap DMA),
    - tile_m is also capped by a VMEM byte budget (double-buffered inputs and
      outputs plus resident weights must fit the scoped VMEM limit),
    - pad fallback is balanced: g = cdiv(M, cap), tm = round_up(cdiv(M, g), 16)
      so at most 16*g - 1 rows of padding.
    """
    budget = max(_VMEM_TILE_BUDGET - fixed_bytes, 1 << 20)
    cap_budget = max(16, (budget // max(per_row_bytes, 1)) // 16 * 16)
    cap = max(16, min(target_tile, cap_budget))
    if M < split_threshold and M * per_row_bytes + fixed_bytes <= _VMEM_TILE_BUDGET:
        return M, M, 1                         # single full-M block (legal for any M)
    g = max(2, _cdiv(M, cap))
    tm = _round_up(_cdiv(M, g), 16)
    return tm * g, tm, g


# ---------------------------------------------------------------------------
# Fused Pallas kernels: one matmul + f32 epilogue each
# ---------------------------------------------------------------------------
def _matmul_bias_relu_kernel(x_ref, w_ref, b_ref, o_ref):
    # relu(x @ w + b); bf16 operands, f32 accumulate/epilogue.
    acc = jnp.dot(x_ref[...], w_ref[...], preferred_element_type=jnp.float32)
    acc = acc + b_ref[...]
    o_ref[...] = jnp.maximum(acc, 0.0).astype(o_ref.dtype)


def _matmul_bias_skip_relu_kernel(x_ref, w_ref, b_ref, r_ref, o_ref):
    # relu(x @ w + b + r); identity-skip residual r stays in f32.
    acc = jnp.dot(x_ref[...], w_ref[...], preferred_element_type=jnp.float32)
    acc = acc + r_ref[...].astype(jnp.float32) + b_ref[...]
    o_ref[...] = jnp.maximum(acc, 0.0).astype(o_ref.dtype)


# ---------------------------------------------------------------------------
# pallas_call wrapper
# ---------------------------------------------------------------------------
def fused_matmul_bias_relu(x, w, b, res=None, *, out_dtype=jnp.float32):
    """relu(x @ w + b [+ res]); x/w bf16, b f32, optional res f32 (M, N)."""
    M, K = x.shape
    Kw, N = w.shape
    assert Kw == K and N % _LANE == 0, (K, Kw, N)

    out_itemsize = np.dtype(out_dtype).itemsize
    res_row_bytes = 0 if res is None else res.shape[1] * np.dtype(res.dtype).itemsize
    per_row = (2 * K * np.dtype(x.dtype).itemsize
               + 2 * res_row_bytes
               + 2 * N * out_itemsize)
    fixed = 2 * K * N * np.dtype(w.dtype).itemsize + 2 * N * 4
    Mp, tm, g = _pick_m_tiling(M, per_row, fixed)

    if Mp != M:
        x = jnp.pad(x, ((0, Mp - M), (0, 0)))
        if res is not None:
            res = jnp.pad(res, ((0, Mp - M), (0, 0)))
    b2 = b.reshape(1, N).astype(jnp.float32)

    in_specs = [
        pl.BlockSpec((tm, K), lambda i: (i, 0)),
        pl.BlockSpec((K, N), lambda i: (0, 0)),
        pl.BlockSpec((1, N), lambda i: (0, 0)),
    ]
    args = [x, w, b2]
    kernel = _matmul_bias_relu_kernel
    if res is not None:
        in_specs.append(pl.BlockSpec((tm, N), lambda i: (i, 0)))
        args.append(res)
        kernel = _matmul_bias_skip_relu_kernel

    out = pl.pallas_call(
        kernel,
        out_shape=jax.ShapeDtypeStruct((Mp, N), out_dtype),
        grid=(g,),
        in_specs=in_specs,
        out_specs=pl.BlockSpec((tm, N), lambda i: (i, 0)),
        compiler_params=pltpu.CompilerParams(
            dimension_semantics=("parallel",),
            vmem_limit_bytes=_VMEM_LIMIT,
        ),
    )(*args)
    return out if Mp == M else out[:M]


# ---------------------------------------------------------------------------
# im2col glue (channels-last, bf16) and weight reshaping
# ---------------------------------------------------------------------------
def _im2col_nhwc(x, k, dilation, stride, extra=None):
    """x: (N,H,W,C) -> (N*oh*ow, k*k*C [+ Ce]); tap order (ki,kj), channel fastest.

    `extra` (N,oh,ow,Ce), if given, is appended as trailing K columns in the
    SAME concatenate (used to fold the 1x1 proj operand without a second copy).
    """
    n, h, w, c = x.shape
    oh = (h - (k - 1) * dilation - 1) // stride + 1
    ow = (w - (k - 1) * dilation - 1) // stride + 1
    cols = []
    for i in range(k):
        for j in range(k):
            r0, c0 = i * dilation, j * dilation
            cols.append(x[:, r0:r0 + (oh - 1) * stride + 1:stride,
                             c0:c0 + (ow - 1) * stride + 1:stride, :])
    kk = k * k * c
    if extra is not None:
        assert extra.shape[:3] == (n, oh, ow), (extra.shape, n, oh, ow)
        cols.append(extra)
        kk += extra.shape[-1]
    patches = jnp.concatenate(cols, axis=-1)
    return patches.reshape(n * oh * ow, kk), (n, oh, ow)


def _w2mat_padded(w, cin_pad, cout_pad):
    # PyTorch (Cout,Cin,kh,kw) -> (kh*kw*cin_pad, cout_pad); matches im2col
    # ordering (tap (ki,kj), channel fastest).  Padded rows/cols are zero.
    cout, cin, kh, kw = w.shape
    wt = jnp.transpose(w, (2, 3, 1, 0))                       # (kh,kw,cin,cout)
    wt = jnp.pad(wt, ((0, 0), (0, 0), (0, cin_pad - cin), (0, cout_pad - cout)))
    return wt.reshape(kh * kw * cin_pad, cout_pad)


def _pad_vec(v, n):
    return v if v.shape[-1] == n else jnp.pad(v, ((0, n - v.shape[-1]),))


# ---------------------------------------------------------------------------
# ResidA forward (bn=False, activation=ReLU; set_padding()/fill() not applied)
# ---------------------------------------------------------------------------
def resida_forward(params, x, *, dilation=1, stride=1):
    n, cin, h, w = x.shape
    nhidden = params["conv0_w"].shape[0]
    nout = params["conv1_w"].shape[0]
    n0p = _round_up(nhidden, _LANE)       # lane-dense hidden channels
    n1p = _round_up(nout, _LANE)          # lane-dense output channels

    xl = jnp.transpose(x, (0, 2, 3, 1))   # NHWC, channels on lanes (f32)
    xl_b = xl.astype(jnp.bfloat16)

    # conv0 (3x3, stride 1, dil 1) + bias + ReLU -> bf16 hfeat, padded channels
    p0, (_, oh0, ow0) = _im2col_nhwc(xl_b, 3, 1, 1)
    w0 = _w2mat_padded(params["conv0_w"], cin, n0p).astype(jnp.bfloat16)
    b0 = _pad_vec(params["conv0_b"], n0p).astype(jnp.float32)
    hfeat = fused_matmul_bias_relu(p0, w0, b0, out_dtype=jnp.bfloat16)
    hfeat = hfeat.reshape(n, oh0, ow0, n0p)

    # conv1 (3x3, dilation, stride) + bias + residual + ReLU
    w1 = _w2mat_padded(params["conv1_w"], n0p, n1p).astype(jnp.bfloat16)
    b1 = _pad_vec(params["conv1_b"], n1p).astype(jnp.float32)

    edge = 1 + dilation                   # conv0.dilation + conv1.dilation
    xr = xl[:, edge:-edge, edge:-edge, :][:, ::stride, ::stride, :]

    if "proj_w" in params:
        # nin != nout: fold the 1x1 proj (bias=False) into the conv1 matmul.
        wp = params["proj_w"].reshape(nout, cin).T            # (cin, nout)
        wp = jnp.pad(wp, ((0, 0), (0, n1p - nout))).astype(jnp.bfloat16)
        p1, (_, oh1, ow1) = _im2col_nhwc(hfeat, 3, dilation, stride,
                                         extra=xr.astype(jnp.bfloat16))
        wcat = jnp.concatenate([w1, wp], axis=0)
        y = fused_matmul_bias_relu(p1, wcat, b1, out_dtype=jnp.float32)
    else:
        # nin == nout: identity skip, added in f32 in the kernel epilogue.
        p1, (_, oh1, ow1) = _im2col_nhwc(hfeat, 3, dilation, stride)
        assert xr.shape[1] == oh1 and xr.shape[2] == ow1, (xr.shape, oh1, ow1)
        res = xr.reshape(n * oh1 * ow1, cin)
        res = jnp.pad(res, ((0, 0), (0, n1p - cin)))
        y = fused_matmul_bias_relu(p1, w1, b1, res=res, out_dtype=jnp.float32)

    y = y.reshape(n, oh1, ow1, n1p)[..., :nout]   # slice padded channels once
    return jnp.transpose(y, (0, 3, 1, 2))          # back to NCHW, f32


# ---------------------------------------------------------------------------
# Pure-JAX reference (correctness check only)
# ---------------------------------------------------------------------------
def resida_reference(params, x, *, dilation=1, stride=1):
    dn = ("NCHW", "OIHW", "NCHW")
    h = jax.lax.conv_general_dilated(x, params["conv0_w"], (1, 1), "VALID",
                                     dimension_numbers=dn,
                                     precision=jax.lax.Precision.HIGHEST)
    h = jnp.maximum(h + params["conv0_b"][None, :, None, None], 0.0)
    y = jax.lax.conv_general_dilated(h, params["conv1_w"], (stride, stride), "VALID",
                                     rhs_dilation=(dilation, dilation),
                                     dimension_numbers=dn,
                                     precision=jax.lax.Precision.HIGHEST)
    y = y + params["conv1_b"][None, :, None, None]
    edge = 1 + dilation
    xr = x[:, :, edge:-edge, edge:-edge]
    if "proj_w" in params:
        xr = jax.lax.conv_general_dilated(xr, params["proj_w"], (stride, stride),
                                          "VALID", dimension_numbers=dn,
                                          precision=jax.lax.Precision.HIGHEST)
    else:
        xr = xr[:, :, ::stride, ::stride]
    return jnp.maximum(y + xr, 0.0)


def _check(params, x, dilation, stride):
    fwd = jax.jit(functools.partial(resida_forward, dilation=dilation, stride=stride))
    y = jax.block_until_ready(fwd(params, x))
    assert not bool(jnp.any(jnp.isnan(y)))
    ref = jax.block_until_ready(resida_reference(params, x,
                                                 dilation=dilation, stride=stride))
    assert y.shape == ref.shape, (y.shape, ref.shape)
    err = float(jnp.max(jnp.abs(y - ref)))
    scale = float(jnp.max(jnp.abs(ref))) + 1e-6
    assert err <= 0.05 * scale + 0.05, ("mismatch vs reference", err, scale)
    return y


if __name__ == "__main__":
    key = jax.random.PRNGKey(0)
    kx, k0, kb0, k1, kb1, kp, kx2, k2, kb2, k3, kb3 = jax.random.split(key, 11)

    # Case 1: ResidA(nin=4, nhidden=32, nout=64) -> proj (1x1, bias=False) path
    nin, nhidden, nout = 4, 32, 64
    params = {
        "conv0_w": 0.1 * jax.random.normal(k0, (nhidden, nin, 3, 3), jnp.float32),
        "conv0_b": 0.1 * jax.random.normal(kb0, (nhidden,), jnp.float32),
        "conv1_w": 0.1 * jax.random.normal(k1, (nout, nhidden, 3, 3), jnp.float32),
        "conv1_b": 0.1 * jax.random.normal(kb1, (nout,), jnp.float32),
        "proj_w": 0.1 * jax.random.normal(kp, (nout, nin, 1, 1), jnp.float32),
    }
    x = jax.random.normal(kx, (2, nin, 16, 16), jnp.float32)
    y = _check(params, x, dilation=1, stride=1)
    assert y.shape == (2, nout, 12, 12), y.shape

    # Case 2: ResidA(nin=8, nhidden=16, nout=8) -> identity-skip path
    nin2, nh2, no2 = 8, 16, 8
    params2 = {
        "conv0_w": 0.1 * jax.random.normal(k2, (nh2, nin2, 3, 3), jnp.float32),
        "conv0_b": 0.1 * jax.random.normal(kb2, (nh2,), jnp.float32),
        "conv1_w": 0.1 * jax.random.normal(k3, (no2, nh2, 3, 3), jnp.float32),
        "conv1_b": 0.1 * jax.random.normal(kb3, (no2,), jnp.float32),
    }
    x2 = jax.random.normal(kx2, (1, nin2, 12, 12), jnp.float32)
    y2 = _check(params2, x2, dilation=1, stride=1)
    assert y2.shape == (1, no2, 8, 8), y2.shape

    print("KERNEL_OK")
</pallas_src>

<mosaic_0001>
module attributes {stable_mosaic.version = 11 : i64} {
  func.func @_matmul_bias_relu_kernel(%arg0: i32, %arg1: memref<208x36xbf16, #tpu.memory_space<vmem>>, %arg2: memref<36x128xbf16, #tpu.memory_space<vmem>>, %arg3: memref<1x128xf32, #tpu.memory_space<vmem>>, %arg4: memref<208x128xbf16, #tpu.memory_space<vmem>>) attributes {dimension_semantics = [#tpu.dimension_semantics<parallel>], iteration_bounds = array<i64: 2>, scalar_prefetch = 0 : i64, scratch_operands = 0 : i64, tpu.core_type = #tpu.core_type<tc>, window_params = [{transform_indices = @transform_0, window_bounds = array<i64: 208, 36>}, {pipeline_mode = #tpu.pipeline_mode<synchronous>, transform_indices = @transform_1, window_bounds = array<i64: 36, 128>}, {pipeline_mode = #tpu.pipeline_mode<synchronous>, transform_indices = @transform_2, window_bounds = array<i64: 1, 128>}, {transform_indices = @transform_3, window_bounds = array<i64: 208, 128>}]} {
    %c0 = arith.constant 0 : index
    %c0_0 = arith.constant 0 : index
    %0 = vector.load %arg1[%c0, %c0_0] : memref<208x36xbf16, #tpu.memory_space<vmem>>, vector<208x36xbf16>
    %c0_1 = arith.constant 0 : index
    %c0_2 = arith.constant 0 : index
    %1 = vector.load %arg2[%c0_1, %c0_2] : memref<36x128xbf16, #tpu.memory_space<vmem>>, vector<36x128xbf16>
    %cst = arith.constant dense<0.000000e+00> : vector<208x128xf32>
    %2 = tpu.matmul %0, %1, %cst {dimension_numbers = #tpu.dot_dimension_numbers<[1], [0], [0], [1], [0, 0, 1, 1], [], []>} : vector<208x36xbf16>, vector<36x128xbf16>, vector<208x128xf32> -> vector<208x128xf32>
    %c0_3 = arith.constant 0 : index
    %c0_4 = arith.constant 0 : index
    %3 = vector.load %arg3[%c0_3, %c0_4] : memref<1x128xf32, #tpu.memory_space<vmem>>, vector<1x128xf32>
    %4 = vector.broadcast %3 : vector<1x128xf32> to vector<208x128xf32>
    %5 = arith.addf %2, %4 : vector<208x128xf32>
    %cst_5 = arith.constant 0.000000e+00 : f32
    %6 = vector.broadcast %cst_5 : f32 to vector<208x128xf32>
    %7 = arith.maximumf %5, %6 : vector<208x128xf32>
    %8 = arith.truncf %7 : vector<208x128xf32> to vector<208x128xbf16>
    %c0_6 = arith.constant 0 : index
    %c0_7 = arith.constant 0 : index
    %9 = vector.load %arg4[%c0_6, %c0_7] : memref<208x128xbf16, #tpu.memory_space<vmem>>, vector<208x128xbf16>
    tpu.vector_store %arg4[%c0_6, %c0_7], %8 {strides = array<i32>} : memref<208x128xbf16, #tpu.memory_space<vmem>>, vector<208x128xbf16>,
    return
  }
  func.func @transform_0(%arg0: i32) -> (i32, i32) {
    %c0_i32 = arith.constant 0 : i32
    %c0_i32_0 = arith.constant 0 : i32
    return %arg0, %c0_i32 : i32, i32
  }
  func.func @transform_1(%arg0: i32) -> (i32, i32) {
    %c0_i32 = arith.constant 0 : i32
    %c0_i32_0 = arith.constant 0 : i32
    %c0_i32_1 = arith.constant 0 : i32
    return %c0_i32, %c0_i32_0 : i32, i32
  }
  func.func @transform_2(%arg0: i32) -> (i32, i32) {
    %c0_i32 = arith.constant 0 : i32
    %c0_i32_0 = arith.constant 0 : i32
    %c0_i32_1 = arith.constant 0 : i32
    return %c0_i32, %c0_i32_0 : i32, i32
  }
  func.func @transform_3(%arg0: i32) -> (i32, i32) {
    %c0_i32 = arith.constant 0 : i32
    %c0_i32_0 = arith.constant 0 : i32
    return %arg0, %c0_i32 : i32, i32
  }
}

module attributes {stable_mosaic.version = 11 : i64} {
  func.func @_matmul_bias_relu_kernel(%arg0: i32, %arg1: memref<144x1156xbf16, #tpu.memory_space<vmem>>, %arg2: memref<1156x128xbf16, #tpu.memory_space<vmem>>, %arg3: memref<1x128xf32, #tpu.memory_space<vmem>>, %arg4: memref<144x128xf32, #tpu.memory_space<vmem>>) attributes {dimension_semantics = [#tpu.dimension_semantics<parallel>], iteration_bounds = array<i64: 2>, scalar_prefetch = 0 : i64, scratch_operands = 0 : i64, tpu.core_type = #tpu.core_type<tc>, window_params = [{transform_indices = @transform_0, window_bounds = array<i64: 144, 1156>}, {pipeline_mode = #tpu.pipeline_mode<synchronous>, transform_indices = @transform_1, window_bounds = array<i64: 1156, 128>}, {pipeline_mode = #tpu.pipeline_mode<synchronous>, transform_indices = @transform_2, window_bounds = array<i64: 1, 128>}, {transform_indices = @transform_3, window_bounds = array<i64: 144, 128>}]} {
    %c0 = arith.constant 0 : index
    %c0_0 = arith.constant 0 : index
    %0 = vector.load %arg1[%c0, %c0_0] : memref<144x1156xbf16, #tpu.memory_space<vmem>>, vector<144x1156xbf16>
    %c0_1 = arith.constant 0 : index
    %c0_2 = arith.constant 0 : index
    %1 = vector.load %arg2[%c0_1, %c0_2] : memref<1156x128xbf16, #tpu.memory_space<vmem>>, vector<1156x128xbf16>
    %cst = arith.constant dense<0.000000e+00> : vector<144x128xf32>
    %2 = tpu.matmul %0, %1, %cst {dimension_numbers = #tpu.dot_dimension_numbers<[1], [0], [0], [1], [0, 0, 1, 1], [], []>} : vector<144x1156xbf16>, vector<1156x128xbf16>, vector<144x128xf32> -> vector<144x128xf32>
    %c0_3 = arith.constant 0 : index
    %c0_4 = arith.constant 0 : index
    %3 = vector.load %arg3[%c0_3, %c0_4] : memref<1x128xf32, #tpu.memory_space<vmem>>, vector<1x128xf32>
    %4 = vector.broadcast %3 : vector<1x128xf32> to vector<144x128xf32>
    %5 = arith.addf %2, %4 : vector<144x128xf32>
    %cst_5 = arith.constant 0.000000e+00 : f32
    %6 = vector.broadcast %cst_5 : f32 to vector<144x128xf32>
    %7 = arith.maximumf %5, %6 : vector<144x128xf32>
    %c0_6 = arith.constant 0 : index
    %c0_7 = arith.constant 0 : index
    %8 = vector.load %arg4[%c0_6, %c0_7] : memref<144x128xf32, #tpu.memory_space<vmem>>, vector<144x128xf32>
    tpu.vector_store %arg4[%c0_6, %c0_7], %7 {strides = array<i32>} : memref<144x128xf32, #tpu.memory_space<vmem>>, vector<144x128xf32>,
    return
  }
  func.func @transform_0(%arg0: i32) -> (i32, i32) {
    %c0_i32 = arith.constant 0 : i32
    %c0_i32_0 = arith.constant 0 : i32
    return %arg0, %c0_i32 : i32, i32
  }
  func.func @transform_1(%arg0: i32) -> (i32, i32) {
    %c0_i32 = arith.constant 0 : i32
    %c0_i32_0 = arith.constant 0 : i32
    %c0_i32_1 = arith.constant 0 : i32
    return %c0_i32, %c0_i32_0 : i32, i32
  }
  func.func @transform_2(%arg0: i32) -> (i32, i32) {
    %c0_i32 = arith.constant 0 : i32
    %c0_i32_0 = arith.constant 0 : i32
    %c0_i32_1 = arith.constant 0 : i32
    return %c0_i32, %c0_i32_0 : i32, i32
  }
  func.func @transform_3(%arg0: i32) -> (i32, i32) {
    %c0_i32 = arith.constant 0 : i32
    %c0_i32_0 = arith.constant 0 : i32
    return %arg0, %c0_i32 : i32, i32
  }
}

</mosaic_0001>

<llo_original>
// kernel: resida_forward.2
$region0: #{resida_forward.2}
  #allocation0 [shape = 'u32[]', space=smem, size = 0x4, offset = 0x4, fixed_abs, tag = 'smem constant byte address 0x4 - core index']
  #allocation1 [shape = 'u32[72,128]{1,0:T(1,128)}', space=vmem, size = 0x9000, scoped, tag = 'internal scratch']
  %s0 = inlined_call_operand.vmem [shape: bf16[416,36], index: 0, kind: input, shape index: {}]
  %s1 = inlined_call_operand.vmem [shape: bf16[36,128], index: 1, kind: input, shape index: {}]
  %s2 = inlined_call_operand.vmem [shape: f32[1,128], index: 2, kind: input, shape index: {}]
  %s3 = inlined_call_operand.vmem [shape: bf16[416,128], index: 3, kind: output, shape index: {}]
  %s4 = sld [smem:[#allocation0]]
  $region45: #{resida_forward.2} parent=0
    _
  %s6 = ssub.s32 1, %s4
  %s7 = scalar_select 0, %s6, %s4
  loop: start=0, step=1, limit=4
  $region2: #{resida_forward.2} parent=0 // loop_pre_header
    _
  $region3: #{resida_forward.2} parent=0 // loop_header
    %s9 = sphi 0, %s13
    %p10 = scmp.ge.s32.totalorder %s9, 4
    %s19 = sphi 0, %s21
    %s22 = sphi 0, %s19
    %s23 = sphi 0, %s22
    %s39 = sphi 0, %s23
    %s43 = sphi 0, %s43
    %s45 = sphi 0, %s43
    %s46 = sphi 0, %s45
    %s60 = sphi 0, %s46
    %s64 = sphi 0, %s64
    %s66 = sphi 0, %s64
    %s67 = sphi 0, %s66
    %s81 = sphi 0, %s67
    %s87 = sphi 0, %s89
    %s90 = sphi 0, %s87
    %s91 = sphi 0, %s90
    %s107 = sphi 0, %s91
  $region4: #{resida_forward.2} parent=0 // loop_header_branch
    %12 = sbr.rel (%p10) target = $region8
  $region5: #{resida_forward.2} parent=0 // loop_body
    %s14 = ssub.s32 %s9, 1
    %s15 = ssub.s32 %s9, 2
    %s16 = sadd.s32 %s9, 1
    %s17 = ssub.s32 %s9, %s16
    %p18 = scmp.eq.s32.totalorder %s17, 0
    %s20 = sadd.s32 %s19, 1
    %s21 = scalar_select %p18, %s19, %s20
    %p24 = pneg %p18
    %p25 = scmp.eq.s32.totalorder %s9, 1
    %p26 = por %p24, %p25
    %p27 = scmp.ne.s32.totalorder %s19, %s22
    %p28 = scmp.eq.s32.totalorder %s9, 0
    %p29 = por %p27, %p28
    %p30 = scmp.ne.s32.totalorder %s19, %s22
    %p31 = scmp.eq.s32.totalorder %s14, 1
    %p32 = por %p30, %p31
    %p33 = scmp.ne.s32.totalorder %s22, %s23
    %p34 = scmp.eq.s32.totalorder %s14, 0
    %p35 = por %p33, %p34
    %p36 = scmp.ne.s32.totalorder %s22, %s23
    %p37 = scmp.eq.s32.totalorder %s15, 1
    %p38 = por %p36, %p37
    %p40 = scmp.ne.s32.totalorder %s23, %s39
    %p41 = scmp.eq.s32.totalorder %s15, 0
    %p42 = por %p40, %p41
    %s44 = sadd.s32 %s43, 1
    %p47 = scmp.eq.s32.totalorder %s9, 1
    %p48 = scmp.ne.s32.totalorder %s43, %s45
    %p49 = scmp.eq.s32.totalorder %s9, 0
    %p50 = por %p48, %p49
    %p51 = scmp.ne.s32.totalorder %s43, %s45
    %p52 = scmp.eq.s32.totalorder %s14, 1
    %p53 = por %p51, %p52
    %p54 = scmp.ne.s32.totalorder %s45, %s46
    %p55 = scmp.eq.s32.totalorder %s14, 0
    %p56 = por %p54, %p55
    %p57 = scmp.ne.s32.totalorder %s45, %s46
    %p58 = scmp.eq.s32.totalorder %s15, 1
    %p59 = por %p57, %p58
    %p61 = scmp.ne.s32.totalorder %s46, %s60
    %p62 = scmp.eq.s32.totalorder %s15, 0
    %p63 = por %p61, %p62
    %s65 = sadd.s32 %s64, 1
    %p68 = scmp.eq.s32.totalorder %s9, 1
    %p69 = scmp.ne.s32.totalorder %s64, %s66
    %p70 = scmp.eq.s32.totalorder %s9, 0
    %p71 = por %p69, %p70
    %p72 = scmp.ne.s32.totalorder %s64, %s66
    %p73 = scmp.eq.s32.totalorder %s14, 1
    %p74 = por %p72, %p73
    %p75 = scmp.ne.s32.totalorder %s66, %s67
    %p76 = scmp.eq.s32.totalorder %s14, 0
    %p77 = por %p75, %p76
    %p78 = scmp.ne.s32.totalorder %s66, %s67
    %p79 = scmp.eq.s32.totalorder %s15, 1
    %p80 = por %p78, %p79
    %p82 = scmp.ne.s32.totalorder %s67, %s81
    %p83 = scmp.eq.s32.totalorder %s15, 0
    %p84 = por %p82, %p83
    %s85 = ssub.s32 %s9, %s16
    %p86 = scmp.eq.s32.totalorder %s85, 0
    %s88 = sadd.s32 %s87, 1
    %s89 = scalar_select %p86, %s87, %s88
    %p92 = pneg %p86
    %p93 = scmp.eq.s32.totalorder %s9, 1
    %p94 = por %p92, %p93
    %p95 = scmp.ne.s32.totalorder %s87, %s90
    %p96 = scmp.eq.s32.totalorder %s9, 0
    %p97 = por %p95, %p96
    %p98 = scmp.ne.s32.totalorder %s87, %s90
    %p99 = scmp.eq.s32.totalorder %s14, 1
    %p100 = por %p98, %p99
    %p101 = scmp.ne.s32.totalorder %s90, %s91
    %p102 = scmp.eq.s32.totalorder %s14, 0
    %p103 = por %p101, %p102
    %p104 = scmp.ne.s32.totalorder %s90, %s91
    %p105 = scmp.eq.s32.totalorder %s15, 1
    %p106 = por %p104, %p105
    %p108 = scmp.ne.s32.totalorder %s91, %s107
    %p109 = scmp.eq.s32.totalorder %s15, 0
    %p110 = por %p108, %p109
    %p111 = scmp.le.s32.totalorder 1, %s9
    %p112 = scmp.lt.s32.totalorder %s9, 3
    %p113 = pnand %p111, %p112
    %p114 = pneg %p113
    // Predicated region
    $region9: #{resida_forward.2} parent=5 // pred_check
      _
    $region10: #{resida_forward.2} parent=5 // pred_check_branch
      %116 = sbr.rel (%p113) target = $region12
    $region11: #{resida_forward.2} parent=5 // pred_region
      %s117 = ssub.s32 %s9, 1
      // Predicated region
      $region13: #{resida_forward.2} parent=11 // pred_check
        %p118 = pneg %p56
      $region14: #{resida_forward.2} parent=11 // pred_check_branch
        %120 = sbr.rel (%p118) target = $region16
      $region15: #{resida_forward.2} parent=11 // pred_region
        _
      $region16: #{resida_forward.2} parent=11 // pred_fallthru
        _
      // Predicated region
      $region17: #{resida_forward.2} parent=11 // pred_check
        %p121 = pneg %p77
      $region18: #{resida_forward.2} parent=11 // pred_check_branch
        %123 = sbr.rel (%p121) target = $region20
      $region19: #{resida_forward.2} parent=11 // pred_region
        _
      $region20: #{resida_forward.2} parent=11 // pred_fallthru
        _
    $region12: #{resida_forward.2} parent=5 // pred_fallthru
      _
    %p124 = scmp.lt.s32.totalorder %s9, 2
    // Predicated region
    $region21: #{resida_forward.2} parent=5 // pred_check
      %p125 = pneg %p124
    $region22: #{resida_forward.2} parent=5 // pred_check_branch
      %127 = sbr.rel (%p125) target = $region24
    $region23: #{resida_forward.2} parent=5 // pred_region
      // Predicated region
      $region25: #{resida_forward.2} parent=23 // pred_check
        %p128 = pneg %p29
      $region26: #{resida_forward.2} parent=23 // pred_check_branch
        %130 = sbr.rel (%p128) target = $region28
      $region27: #{resida_forward.2} parent=23 // pred_region
        %s131 = smul.u32 26, %s9
        %p132 = scmp.lt.s32.totalorder %s131, 51
        %s133 = scalar_select %p132, %s131, 51
        %s134 = smul.addr %s133, 4
        %s135 = scalar_lea.vmem %s0, %s134
        %s136 = smul.u32 26, %s9
      $region28: #{resida_forward.2} parent=23 // pred_fallthru
        _
    $region24: #{resida_forward.2} parent=5 // pred_fallthru
      _
    %p137 = scmp.le.s32.totalorder 1, %s9
    %p138 = scmp.lt.s32.totalorder %s9, 3
    %p139 = pnand %p137, %p138
    %p140 = pneg %p139
    // Predicated region
    $region29: #{resida_forward.2} parent=5 // pred_check
      _
    $region30: #{resida_forward.2} parent=5 // pred_check_branch
      %142 = sbr.rel (%p139) target = $region32
    $region31: #{resida_forward.2} parent=5 // pred_region
      %s143 = ssub.s32 %s9, 1
      %s144 = smul.u32 26, %s14
      %p145 = scmp.lt.s32.totalorder %s144, 51
      %s146 = scalar_select %p145, %s144, 51
      %s147 = smul.addr %s146, 4
      %s148 = scalar_lea.vmem %s0, %s147
      %p149 = pneg %p35
      %p150 = pneg %p32
      %p151 = pneg %p56
      %p152 = pneg %p53
      %p153 = pneg %p77
      %p154 = pneg %p74
      %p155 = pneg %p103
      %p156 = pneg %p100
      %s157 = smul.u32 26, %s14
      %p158 = scmp.lt.s32.totalorder %s157, 51
      %s159 = scalar_select %p158, %s157, 51
      %s160 = smul.addr %s159, 4
      %s161 = scalar_lea.vmem %s3, %s160
      %s162 = smul.u32 26, %s14
      %p163 = scmp.lt.s32.totalorder %s162, 51
      %s164 = scalar_select %p163, %s162, 51
      %s165 = smul.addr %s164, 4
      %s166 = scalar_lea.vmem %s0, %s165
      %s167 = smul.u32 26, %s14
      %s168 = smul.u32 26, %s14
      %p169 = scmp.lt.s32.totalorder %s168, 51
      %s170 = scalar_select %p169, %s168, 51
      %s171 = smul.addr %s170, 4
      %s172 = scalar_lea.vmem %s3, %s171
      %s173 = smul.u32 26, %s14
      %v175 = vld [vmem:[%s166] sm:$0xf]
      %v176 = vld [vmem:[%s166 + $0x4] sm:$0xf]
      %v177 = vld [vmem:[%s166 + $0x8] sm:$0xf]
      %v178 = vld [vmem:[%s166 + $0xc] sm:$0xf]
      %v179 = vld [vmem:[%s166 + $0x10] sm:$0xf]
      %v180 = vld [vmem:[%s166 + $0x14] sm:$0xf]
      %v181 = vld [vmem:[%s166 + $0x18] sm:$0xf]
      %v182 = vld [vmem:[%s166 + $0x1c] sm:$0xf]
      %v183 = vld [vmem:[%s166 + $0x20] sm:$0xf]
      %v184 = vld [vmem:[%s166 + $0x24] sm:$0xf]
      %v185 = vld [vmem:[%s166 + $0x28] sm:$0xf]
      %v186 = vld [vmem:[%s166 + $0x2c] sm:$0xf]
      %v187 = vld [vmem:[%s166 + $0x30] sm:$0xf]
      %v188 = vld [vmem:[%s166 + $0x34] sm:$0xf]
      %v189 = vld [vmem:[%s166 + $0x38] sm:$0xf]
      %v190 = vld [vmem:[%s166 + $0x3c] sm:$0xf]
      %v191 = vld [vmem:[%s166 + $0x40] sm:$0xf]
      %v192 = vld [vmem:[%s166 + $0x44] sm:$0xf]
      %v193 = vld [vmem:[%s166 + $0x48] sm:$0xf]
      %v194 = vld [vmem:[%s166 + $0x4c] sm:$0xf]
      %v195 = vld [vmem:[%s166 + $0x50] sm:$0xf]
      %v196 = vld [vmem:[%s166 + $0x54] sm:$0xf]
      %v197 = vld [vmem:[%s166 + $0x58] sm:$0xf]
      %v198 = vld [vmem:[%s166 + $0x5c] sm:$0xf]
      %v199 = vld [vmem:[%s166 + $0x60] sm:$0xf]
      %v200 = vld [vmem:[%s166 + $0x64] sm:$0xf]
      %v201 = vld [vmem:[%s1] sm:$0xf]
      %v202 = vld [vmem:[%s1 + $0x4] sm:$0xf]
      %v203 = vld [vmem:[%s1 + $0x8] sm:$0xf]
      %v204 = vld [vmem:[%s1 + $0xc] sm:$0xf]
      %v205 = vld [vmem:[%s1 + $0x10] sm:$0x3]
      %v206 = vld [vmem:[%s2] sm:$0x1]
      %v208 = vperm.slane %v206, 0
      %v236 = vunpack.c.l.b16 %v175
      %v237 = vunpack.c.l.b16 %v176
      %v238 = vunpack.c.l.b16 %v177
      %v239 = vunpack.c.l.b16 %v178
      %v240 = vunpack.c.l.b16 %v179
      %v241 = vunpack.c.l.b16 %v180
      %v242 = vunpack.c.l.b16 %v181
      %v243 = vunpack.c.l.b16 %v182
      %v244 = vunpack.c.l.b16 %v183
      %v245 = vunpack.c.l.b16 %v184
      %v246 = vunpack.c.l.b16 %v185
      %v247 = vunpack.c.l.b16 %v186
      %v248 = vunpack.c.l.b16 %v187
      %v249 = vunpack.c.l.b16 %v188
      %v250 = vunpack.c.l.b16 %v189
      %v251 = vunpack.c.l.b16 %v190
      %v252 = vunpack.c.l.b16 %v191
      %v253 = vunpack.c.l.b16 %v192
      %v254 = vunpack.c.l.b16 %v193
      %v255 = vunpack.c.l.b16 %v194
      %v256 = vunpack.c.l.b16 %v195
      %v257 = vunpack.c.l.b16 %v196
      %v258 = vunpack.c.l.b16 %v197
      %v259 = vunpack.c.l.b16 %v198
      %v260 = vunpack.c.l.b16 %v199
      %v261 = vunpack.c.l.b16 %v200
      %v262 = vpack.c.b16 %v237, %v236
      %v263 = vpack.c.b16 %v239, %v238
      %v264 = vpack.c.b16 %v241, %v240
      %v265 = vpack.c.b16 %v243, %v242
      %v266 = vpack.c.b16 %v245, %v244
      %v267 = vpack.c.b16 %v247, %v246
      %v268 = vpack.c.b16 %v249, %v248
      %v269 = vpack.c.b16 %v251, %v250
      %v270 = vpack.c.b16 %v253, %v252
      %v271 = vpack.c.b16 %v255, %v254
      %v272 = vpack.c.b16 %v257, %v256
      %v273 = vpack.c.b16 %v259, %v258
      %v274 = vpack.c.b16 %v261, %v260
      %v280 = vunpack.c.l.b16 %v201
      %v281 = vunpack.c.l.b16 %v202
      %v282 = vunpack.c.l.b16 %v203
      %v283 = vunpack.c.l.b16 %v204
      %v284 = vunpack.c.l.b16 %v205
      %v285 = vpack.c.b16 %v281, %v280
      %v286 = vpack.c.b16 %v283, %v282
      %v287 = vpack.c.b16 %v284, %v284
      %vm290 = vcmask 293888
      %v292 = vsel %vm290, %v262, 0
      %v295 = vsel %vm290, %v263, 0
      %v298 = vsel %vm290, %v264, 0
      %v301 = vsel %vm290, %v265, 0
      %v304 = vsel %vm290, %v266, 0
      %v307 = vsel %vm290, %v267, 0
      %v310 = vsel %vm290, %v268, 0
      %v313 = vsel %vm290, %v269, 0
      %v316 = vsel %vm290, %v270, 0
      %v319 = vsel %vm290, %v271, 0
      %v322 = vsel %vm290, %v272, 0
      %v325 = vsel %vm290, %v273, 0
      %v328 = vsel %vm290, %v274, 0
      %vm330 = vcmask 1041408
      %v332 = vsel %vm330, %v287, 0
      %334 = vmatpush.bf16.msra.mxu0 0
      %335 = vmatpush.bf16.msra.mxu0 0
      %336 = vmatpush.bf16.msra.mxu0 0
      %337 = vmatpush.bf16.msra.mxu0 0
      %338 = vmatpush.bf16.msra.mxu0 0
      %339 = vmatpush.bf16.msra.mxu0 %v332
      %340 = vmatpush.bf16.msra.mxu0 %v286
      %341 = vmatpush.bf16.msra.mxu0 %v285
      %342 = vmatmul.bf16.gmra.mxu0 %v292
      %v343 = vpop.f32.mrf.mxu0
      %v344 = vadd.f32 %v208, %v343
      %v345 = vpop.f32.mrf.mxu0
      %v346 = vadd.f32 %v208, %v345
      %347 = vmatmul.bf16.gmra.mxu0 %v295
      %v348 = vpop.f32.mrf.mxu0
      %v349 = vadd.f32 %v208, %v348
      %v350 = vpop.f32.mrf.mxu0
      %v351 = vadd.f32 %v208, %v350
      %352 = vmatmul.bf16.gmra.mxu0 %v298
      %v353 = vpop.f32.mrf.mxu0
      %v354 = vadd.f32 %v208, %v353
      %v355 = vpop.f32.mrf.mxu0
      %v356 = vadd.f32 %v208, %v355
      %357 = vmatmul.bf16.gmra.mxu0 %v301
      %v358 = vpop.f32.mrf.mxu0
      %v359 = vadd.f32 %v208, %v358
      %v360 = vpop.f32.mrf.mxu0
      %v361 = vadd.f32 %v208, %v360
      %362 = vmatmul.bf16.gmra.mxu0 %v304
      %v363 = vpop.f32.mrf.mxu0
      %v364 = vadd.f32 %v208, %v363
      %v365 = vpop.f32.mrf.mxu0
      %v366 = vadd.f32 %v208, %v365
      %367 = vmatmul.bf16.gmra.mxu0 %v307
      %v368 = vpop.f32.mrf.mxu0
      %v369 = vadd.f32 %v208, %v368
      %v370 = vpop.f32.mrf.mxu0
      %v371 = vadd.f32 %v208, %v370
      %372 = vmatmul.bf16.gmra.mxu0 %v310
      %v373 = vpop.f32.mrf.mxu0
      %v374 = vadd.f32 %v208, %v373
      %v375 = vpop.f32.mrf.mxu0
      %v376 = vadd.f32 %v208, %v375
      %377 = vmatmul.bf16.gmra.mxu0 %v313
      %v378 = vpop.f32.mrf.mxu0
      %v379 = vadd.f32 %v208, %v378
      %v380 = vpop.f32.mrf.mxu0
      %v381 = vadd.f32 %v208, %v380
      %382 = vmatmul.bf16.gmra.mxu0 %v316
      %v383 = vpop.f32.mrf.mxu0
      %v384 = vadd.f32 %v208, %v383
      %v385 = vpop.f32.mrf.mxu0
      %v386 = vadd.f32 %v208, %v385
      %387 = vmatmul.bf16.gmra.mxu0 %v319
      %v388 = vpop.f32.mrf.mxu0
      %v389 = vadd.f32 %v208, %v388
      %v390 = vpop.f32.mrf.mxu0
      %v391 = vadd.f32 %v208, %v390
      %392 = vmatmul.bf16.gmra.mxu0 %v322
      %v393 = vpop.f32.mrf.mxu0
      %v394 = vadd.f32 %v208, %v393
      %v395 = vpop.f32.mrf.mxu0
      %v396 = vadd.f32 %v208, %v395
      %397 = vmatmul.bf16.gmra.mxu0 %v325
      %v398 = vpop.f32.mrf.mxu0
      %v399 = vadd.f32 %v208, %v398
      %v400 = vpop.f32.mrf.mxu0
      %v401 = vadd.f32 %v208, %v400
      %402 = vmatmul.bf16.gmra.mxu0 %v328
      %v403 = vpop.f32.mrf.mxu0
      %v404 = vadd.f32 %v208, %v403
      %v405 = vpop.f32.mrf.mxu0
      %v406 = vadd.f32 %v208, %v405
      %407 = vdwg.mxu0
      %v408 = vmax.f32 %v344, 0.0
      %v409 = vmax.f32 %v346, 0.0
      %v410 = vmax.f32 %v349, 0.0
      %v411 = vmax.f32 %v351, 0.0
      %v412 = vmax.f32 %v354, 0.0
      %v413 = vmax.f32 %v356, 0.0
      %v414 = vmax.f32 %v359, 0.0
      %v415 = vmax.f32 %v361, 0.0
      %v416 = vmax.f32 %v364, 0.0
      %v417 = vmax.f32 %v366, 0.0
      %v418 = vmax.f32 %v369, 0.0
      %v419 = vmax.f32 %v371, 0.0
      %v420 = vmax.f32 %v374, 0.0
      %v421 = vmax.f32 %v376, 0.0
      %v422 = vmax.f32 %v379, 0.0
      %v423 = vmax.f32 %v381, 0.0
      %v424 = vmax.f32 %v384, 0.0
      %v425 = vmax.f32 %v386, 0.0
      %v426 = vmax.f32 %v389, 0.0
      %v427 = vmax.f32 %v391, 0.0
      %v428 = vmax.f32 %v394, 0.0
      %v429 = vmax.f32 %v396, 0.0
      %v430 = vmax.f32 %v399, 0.0
      %v431 = vmax.f32 %v401, 0.0
      %v432 = vmax.f32 %v404, 0.0
      %v433 = vmax.f32 %v406, 0.0
      %v434 = vpack.c.bf16 %v408, %v408
      %v435 = vpack.c.bf16 %v409, %v409
      %v436 = vpack.c.bf16 %v410, %v410
      %v437 = vpack.c.bf16 %v411, %v411
      %v438 = vpack.c.bf16 %v412, %v412
      %v439 = vpack.c.bf16 %v413, %v413
      %v440 = vpack.c.bf16 %v414, %v414
      %v441 = vpack.c.bf16 %v415, %v415
      %v442 = vpack.c.bf16 %v416, %v416
      %v443 = vpack.c.bf16 %v417, %v417
      %v444 = vpack.c.bf16 %v418, %v418
      %v445 = vpack.c.bf16 %v419, %v419
      %v446 = vpack.c.bf16 %v420, %v420
      %v447 = vpack.c.bf16 %v421, %v421
      %v448 = vpack.c.bf16 %v422, %v422
      %v449 = vpack.c.bf16 %v423, %v423
      %v450 = vpack.c.bf16 %v424, %v424
      %v451 = vpack.c.bf16 %v425, %v425
      %v452 = vpack.c.bf16 %v426, %v426
      %v453 = vpack.c.bf16 %v427, %v427
      %v454 = vpack.c.bf16 %v428, %v428
      %v455 = vpack.c.bf16 %v429, %v429
      %v456 = vpack.c.bf16 %v430, %v430
      %v457 = vpack.c.bf16 %v431, %v431
      %v458 = vpack.c.bf16 %v432, %v432
      %v459 = vpack.c.bf16 %v433, %v433
      %460 = vst [vmem:[%s172] sm:$0xf] %v434
      %461 = vst [vmem:[%s172 + $0x4] sm:$0xf] %v435
      %462 = vst [vmem:[%s172 + $0x8] sm:$0xf] %v436
      %463 = vst [vmem:[%s172 + $0xc] sm:$0xf] %v437
      %464 = vst [vmem:[%s172 + $0x10] sm:$0xf] %v438
      %465 = vst [vmem:[%s172 + $0x14] sm:$0xf] %v439
      %466 = vst [vmem:[%s172 + $0x18] sm:$0xf] %v440
      %467 = vst [vmem:[%s172 + $0x1c] sm:$0xf] %v441
      %468 = vst [vmem:[%s172 + $0x20] sm:$0xf] %v442
      %469 = vst [vmem:[%s172 + $0x24] sm:$0xf] %v443
      %470 = vst [vmem:[%s172 + $0x28] sm:$0xf] %v444
      %471 = vst [vmem:[%s172 + $0x2c] sm:$0xf] %v445
      %472 = vst [vmem:[%s172 + $0x30] sm:$0xf] %v446
      %473 = vst [vmem:[%s172 + $0x34] sm:$0xf] %v447
      %474 = vst [vmem:[%s172 + $0x38] sm:$0xf] %v448
      %475 = vst [vmem:[%s172 + $0x3c] sm:$0xf] %v449
      %476 = vst [vmem:[%s172 + $0x40] sm:$0xf] %v450
      %477 = vst [vmem:[%s172 + $0x44] sm:$0xf] %v451
      %478 = vst [vmem:[%s172 + $0x48] sm:$0xf] %v452
      %479 = vst [vmem:[%s172 + $0x4c] sm:$0xf] %v453
      %480 = vst [vmem:[%s172 + $0x50] sm:$0xf] %v454
      %481 = vst [vmem:[%s172 + $0x54] sm:$0xf] %v455
      %482 = vst [vmem:[%s172 + $0x58] sm:$0xf] %v456
      %483 = vst [vmem:[%s172 + $0x5c] sm:$0xf] %v457
      %484 = vst [vmem:[%s172 + $0x60] sm:$0xf] %v458
      %485 = vst [vmem:[%s172 + $0x64] sm:$0xf] %v459
      %s486 = smul.u32 26, %s14
      %p487 = scmp.lt.s32.totalorder %s486, 51
      %s488 = scalar_select %p487, %s486, 51
      %s489 = smul.addr %s488, 4
      %s490 = scalar_lea.vmem %s3, %s489
      // Predicated region
      $region33: #{resida_forward.2} parent=31 // pred_check
        %p491 = pneg %p100
      $region34: #{resida_forward.2} parent=31 // pred_check_branch
        %493 = sbr.rel (%p491) target = $region36
      $region35: #{resida_forward.2} parent=31 // pred_region
        %s494 = smul.u32 26, %s14
      $region36: #{resida_forward.2} parent=31 // pred_fallthru
        _
    $region32: #{resida_forward.2} parent=5 // pred_fallthru
      _
    %p495 = scmp.le.s32.totalorder 2, %s9
    // Predicated region
    $region37: #{resida_forward.2} parent=5 // pred_check
      %p496 = pneg %p495
    $region38: #{resida_forward.2} parent=5 // pred_check_branch
      %498 = sbr.rel (%p496) target = $region40
    $region39: #{resida_forward.2} parent=5 // pred_region
      %s499 = ssub.s32 %s9, 2
      // Predicated region
      $region41: #{resida_forward.2} parent=39 // pred_check
        %p500 = pneg %p106
      $region42: #{resida_forward.2} parent=39 // pred_check_branch
        %502 = sbr.rel (%p500) target = $region44
      $region43: #{resida_forward.2} parent=39 // pred_region
        %s503 = smul.u32 26, %s15
        %p504 = scmp.lt.s32.totalorder %s503, 51
        %s505 = scalar_select %p504, %s503, 51
        %s506 = smul.addr %s505, 4
        %s507 = scalar_lea.vmem %s3, %s506
      $region44: #{resida_forward.2} parent=39 // pred_fallthru
        _
    $region40: #{resida_forward.2} parent=5 // pred_fallthru
      _
  $region6: #{resida_forward.2} parent=0 // loop_footer
    %s13 = sadd.s32 1, %s9
  $region7: #{resida_forward.2} parent=0 // loop_footer_branch
    %8 = sbr.rel target = $region3
  $region8: #{resida_forward.2} parent=0 // loop_exit
    _

// kernel: resida_forward.3
$region0: #{resida_forward.3}
  #allocation0 [shape = 'u32[]', space=smem, size = 0x4, offset = 0x4, fixed_abs, tag = 'smem constant byte address 0x4 - core index']
  #allocation1 [shape = 'u32[72,128]{1,0:T(1,128)}', space=vmem, size = 0x9000, scoped, tag = 'internal scratch']
  %s0 = inlined_call_operand.vmem [shape: bf16[288,1156], index: 0, kind: input, shape index: {}]
  %s1 = inlined_call_operand.vmem [shape: bf16[1156,128], index: 1, kind: input, shape index: {}]
  %s2 = inlined_call_operand.vmem [shape: f32[1,128], index: 2, kind: input, shape index: {}]
  %s3 = inlined_call_operand.vmem [shape: f32[288,128], index: 3, kind: output, shape index: {}]
  %s4 = sld [smem:[#allocation0]]
  $region45: #{resida_forward.3} parent=0
    _
  %s6 = ssub.s32 1, %s4
  %s7 = scalar_select 0, %s6, %s4
  loop: start=0, step=1, limit=4
  $region2: #{resida_forward.3} parent=0 // loop_pre_header
    _
  $region3: #{resida_forward.3} parent=0 // loop_header
    %s9 = sphi 0, %s13
    %p10 = scmp.ge.s32.totalorder %s9, 4
    %s19 = sphi 0, %s21
    %s22 = sphi 0, %s19
    %s23 = sphi 0, %s22
    %s39 = sphi 0, %s23
    %s43 = sphi 0, %s43
    %s45 = sphi 0, %s43
    %s46 = sphi 0, %s45
    %s60 = sphi 0, %s46
    %s64 = sphi 0, %s64
    %s66 = sphi 0, %s64
    %s67 = sphi 0, %s66
    %s81 = sphi 0, %s67
    %s87 = sphi 0, %s89
    %s90 = sphi 0, %s87
    %s91 = sphi 0, %s90
    %s107 = sphi 0, %s91
  $region4: #{resida_forward.3} parent=0 // loop_header_branch
    %12 = sbr.rel (%p10) target = $region8
  $region5: #{resida_forward.3} parent=0 // loop_body
    %s14 = ssub.s32 %s9, 1
    %s15 = ssub.s32 %s9, 2
    %s16 = sadd.s32 %s9, 1
    %s17 = ssub.s32 %s9, %s16
    %p18 = scmp.eq.s32.totalorder %s17, 0
    %s20 = sadd.s32 %s19, 1
    %s21 = scalar_select %p18, %s19, %s20
    %p24 = pneg %p18
    %p25 = scmp.eq.s32.totalorder %s9, 1
    %p26 = por %p24, %p25
    %p27 = scmp.ne.s32.totalorder %s19, %s22
    %p28 = scmp.eq.s32.totalorder %s9, 0
    %p29 = por %p27, %p28
    %p30 = scmp.ne.s32.totalorder %s19, %s22
    %p31 = scmp.eq.s32.totalorder %s14, 1
    %p32 = por %p30, %p31
    %p33 = scmp.ne.s32.totalorder %s22, %s23
    %p34 = scmp.eq.s32.totalorder %s14, 0
    %p35 = por %p33, %p34
    %p36 = scmp.ne.s32.totalorder %s22, %s23
    %p37 = scmp.eq.s32.totalorder %s15, 1
    %p38 = por %p36, %p37
    %p40 = scmp.ne.s32.totalorder %s23, %s39
    %p41 = scmp.eq.s32.totalorder %s15, 0
    %p42 = por %p40, %p41
    %s44 = sadd.s32 %s43, 1
    %p47 = scmp.eq.s32.totalorder %s9, 1
    %p48 = scmp.ne.s32.totalorder %s43, %s45
    %p49 = scmp.eq.s32.totalorder %s9, 0
    %p50 = por %p48, %p49
    %p51 = scmp.ne.s32.totalorder %s43, %s45
    %p52 = scmp.eq.s32.totalorder %s14, 1
    %p53 = por %p51, %p52
    %p54 = scmp.ne.s32.totalorder %s45, %s46
    %p55 = scmp.eq.s32.totalorder %s14, 0
    %p56 = por %p54, %p55
    %p57 = scmp.ne.s32.totalorder %s45, %s46
    %p58 = scmp.eq.s32.totalorder %s15, 1
    %p59 = por %p57, %p58
    %p61 = scmp.ne.s32.totalorder %s46, %s60
    %p62 = scmp.eq.s32.totalorder %s15, 0
    %p63 = por %p61, %p62
    %s65 = sadd.s32 %s64, 1
    %p68 = scmp.eq.s32.totalorder %s9, 1
    %p69 = scmp.ne.s32.totalorder %s64, %s66
    %p70 = scmp.eq.s32.totalorder %s9, 0
    %p71 = por %p69, %p70
    %p72 = scmp.ne.s32.totalorder %s64, %s66
    %p73 = scmp.eq.s32.totalorder %s14, 1
    %p74 = por %p72, %p73
    %p75 = scmp.ne.s32.totalorder %s66, %s67
    %p76 = scmp.eq.s32.totalorder %s14, 0
    %p77 = por %p75, %p76
    %p78 = scmp.ne.s32.totalorder %s66, %s67
    %p79 = scmp.eq.s32.totalorder %s15, 1
    %p80 = por %p78, %p79
    %p82 = scmp.ne.s32.totalorder %s67, %s81
    %p83 = scmp.eq.s32.totalorder %s15, 0
    %p84 = por %p82, %p83
    %s85 = ssub.s32 %s9, %s16
    %p86 = scmp.eq.s32.totalorder %s85, 0
    %s88 = sadd.s32 %s87, 1
    %s89 = scalar_select %p86, %s87, %s88
    %p92 = pneg %p86
    %p93 = scmp.eq.s32.totalorder %s9, 1
    %p94 = por %p92, %p93
    %p95 = scmp.ne.s32.totalorder %s87, %s90
    %p96 = scmp.eq.s32.totalorder %s9, 0
    %p97 = por %p95, %p96
    %p98 = scmp.ne.s32.totalorder %s87, %s90
    %p99 = scmp.eq.s32.totalorder %s14, 1
    %p100 = por %p98, %p99
    %p101 = scmp.ne.s32.totalorder %s90, %s91
    %p102 = scmp.eq.s32.totalorder %s14, 0
    %p103 = por %p101, %p102
    %p104 = scmp.ne.s32.totalorder %s90, %s91
    %p105 = scmp.eq.s32.totalorder %s15, 1
    %p106 = por %p104, %p105
    %p108 = scmp.ne.s32.totalorder %s91, %s107
    %p109 = scmp.eq.s32.totalorder %s15, 0
    %p110 = por %p108, %p109
    %p111 = scmp.le.s32.totalorder 1, %s9
    %p112 = scmp.lt.s32.totalorder %s9, 3
    %p113 = pnand %p111, %p112
    %p114 = pneg %p113
    // Predicated region
    $region9: #{resida_forward.3} parent=5 // pred_check
      _
    $region10: #{resida_forward.3} parent=5 // pred_check_branch
      %116 = sbr.rel (%p113) target = $region12
    $region11: #{resida_forward.3} parent=5 // pred_region
      %s117 = ssub.s32 %s9, 1
      // Predicated region
      $region13: #{resida_forward.3} parent=11 // pred_check
        %p118 = pneg %p56
      $region14: #{resida_forward.3} parent=11 // pred_check_branch
        %120 = sbr.rel (%p118) target = $region16
      $region15: #{resida_forward.3} parent=11 // pred_region
        _
      $region16: #{resida_forward.3} parent=11 // pred_fallthru
        _
      // Predicated region
      $region17: #{resida_forward.3} parent=11 // pred_check
        %p121 = pneg %p77
      $region18: #{resida_forward.3} parent=11 // pred_check_branch
        %123 = sbr.rel (%p121) target = $region20
      $region19: #{resida_forward.3} parent=11 // pred_region
        _
      $region20: #{resida_forward.3} parent=11 // pred_fallthru
        _
    $region12: #{resida_forward.3} parent=5 // pred_fallthru
      _
    %p124 = scmp.lt.s32.totalorder %s9, 2
    // Predicated region
    $region21: #{resida_forward.3} parent=5 // pred_check
      %p125 = pneg %p124
    $region22: #{resida_forward.3} parent=5 // pred_check_branch
      %127 = sbr.rel (%p125) target = $region24
    $region23: #{resida_forward.3} parent=5 // pred_region
      // Predicated region
      $region25: #{resida_forward.3} parent=23 // pred_check
        %p128 = pneg %p29
      $region26: #{resida_forward.3} parent=23 // pred_check_branch
        %130 = sbr.rel (%p128) target = $region28
      $region27: #{resida_forward.3} parent=23 // pred_region
        %s131 = smul.u32 18, %s9
        %p132 = scmp.lt.s32.totalorder %s131, 35
        %s133 = scalar_select %p132, %s131, 35
        %s134 = smul.addr %s133, 10
        %s135 = smul.addr %s134, 4
        %s136 = scalar_lea.vmem %s0, %s135
        %s137 = smul.u32 18, %s9
      $region28: #{resida_forward.3} parent=23 // pred_fallthru
        _
    $region24: #{resida_forward.3} parent=5 // pred_fallthru
      _
    %p138 = scmp.le.s32.totalorder 1, %s9
    %p139 = scmp.lt.s32.totalorder %s9, 3
    %p140 = pnand %p138, %p139
    %p141 = pneg %p140
    // Predicated region
    $region29: #{resida_forward.3} parent=5 // pred_check
      _
    $region30: #{resida_forward.3} parent=5 // pred_check_branch
      %143 = sbr.rel (%p140) target = $region32
    $region31: #{resida_forward.3} parent=5 // pred_region
      %s144 = ssub.s32 %s9, 1
      %s145 = smul.u32 18, %s14
      %p146 = scmp.lt.s32.totalorder %s145, 35
      %s147 = scalar_select %p146, %s145, 35
      %s148 = smul.addr %s147, 10
      %s149 = smul.addr %s148, 4
      %s150 = scalar_lea.vmem %s0, %s149
      %p151 = pneg %p35
      %p152 = pneg %p32
      %p153 = pneg %p56
      %p154 = pneg %p53
      %p155 = pneg %p77
      %p156 = pneg %p74
      %p157 = pneg %p103
      %p158 = pneg %p100
      %s159 = smul.u32 18, %s14
      %p160 = scmp.lt.s32.totalorder %s159, 35
      %s161 = scalar_select %p160, %s159, 35
      %s162 = smul.addr %s161, 8
      %s163 = scalar_lea.vmem %s3, %s162
      %s164 = smul.u32 18, %s14
      %p165 = scmp.lt.s32.totalorder %s164, 35
      %s166 = scalar_select %p165, %s164, 35
      %s167 = smul.addr %s166, 10
      %s168 = smul.addr %s167, 4
      %s169 = scalar_lea.vmem %s0, %s168
      %s170 = smul.u32 18, %s14
      %s171 = smul.u32 18, %s14
      %p172 = scmp.lt.s32.totalorder %s171, 35
      %s173 = scalar_select %p172, %s171, 35
      %s174 = smul.addr %s173, 8
      %s175 = scalar_lea.vmem %s3, %s174
      %s176 = smul.u32 18, %s14
      %v178 = vld [vmem:[%s169] sm:$0xff]
      %v179 = vld [vmem:[%s169 + $0x8] sm:$0xff]
      %v180 = vld [vmem:[%s169 + $0x10] sm:$0xff]
      %v181 = vld [vmem:[%s169 + $0x18] sm:$0xff]
      %v182 = vld [vmem:[%s169 + $0x20] sm:$0xff]
      %v183 = vld [vmem:[%s169 + $0x28] sm:$0xff]
      %v184 = vld [vmem:[%s169 + $0x30] sm:$0xff]
      %v185 = vld [vmem:[%s169 + $0x38] sm:$0xff]
      %v186 = vld [vmem:[%s169 + $0x40] sm:$0xff]
      %v187 = vld [vmem:[%s169 + $0x48] sm:$0xff]
      %v188 = vld [vmem:[%s169 + $0x50] sm:$0xff]
      %v189 = vld [vmem:[%s169 + $0x58] sm:$0xff]
      %v190 = vld [vmem:[%s169 + $0x60] sm:$0xff]
      %v191 = vld [vmem:[%s169 + $0x68] sm:$0xff]
      %v192 = vld [vmem:[%s169 + $0x70] sm:$0xff]
      %v193 = vld [vmem:[%s169 + $0x78] sm:$0xff]
      %v194 = vld [vmem:[%s169 + $0x80] sm:$0xff]
      %v195 = vld [vmem:[%s169 + $0x88] sm:$0xff]
      %v196 = vld [vmem:[%s169 + $0x90] sm:$0xff]
      %v197 = vld [vmem:[%s169 + $0x98] sm:$0xff]
      %v198 = vld [vmem:[%s169 + $0xa0] sm:$0xff]
      %v199 = vld [vmem:[%s169 + $0xa8] sm:$0xff]
      %v200 = vld [vmem:[%s169 + $0xb0] sm:$0xff]
      %v201 = vld [vmem:[%s169 + $0xb8] sm:$0xff]
      %v202 = vld [vmem:[%s169 + $0xc0] sm:$0xff]
      %v203 = vld [vmem:[%s169 + $0xc8] sm:$0xff]
      %v204 = vld [vmem:[%s169 + $0xd0] sm:$0xff]
      %v205 = vld [vmem:[%s169 + $0xd8] sm:$0xff]
      %v206 = vld [vmem:[%s169 + $0xe0] sm:$0xff]
      %v207 = vld [vmem:[%s169 + $0xe8] sm:$0xff]
      %v208 = vld [vmem:[%s169 + $0xf0] sm:$0xff]
      %v209 = vld [vmem:[%s169 + $0xf8] sm:$0xff]
      %v210 = vld [vmem:[%s169 + $0x100] sm:$0xff]
      %v211 = vld [vmem:[%s169 + $0x108] sm:$0xff]
      %v212 = vld [vmem:[%s169 + $0x110] sm:$0xff]
      %v213 = vld [vmem:[%s169 + $0x118] sm:$0xff]
      %v214 = vld [vmem:[%s169 + $0x120] sm:$0xff]
      %v215 = vld [vmem:[%s169 + $0x128] sm:$0xff]
      %v216 = vld [vmem:[%s169 + $0x130] sm:$0xff]
      %v217 = vld [vmem:[%s169 + $0x138] sm:$0xff]
      %v218 = vld [vmem:[%s169 + $0x140] sm:$0xff]
      %v219 = vld [vmem:[%s169 + $0x148] sm:$0xff]
      %v220 = vld [vmem:[%s169 + $0x150] sm:$0xff]
      %v221 = vld [vmem:[%s169 + $0x158] sm:$0xff]
      %v222 = vld [vmem:[%s169 + $0x160] sm:$0xff]
      %v223 = vld [vmem:[%s169 + $0x168] sm:$0xff]
      %v224 = vld [vmem:[%s169 + $0x170] sm:$0xff]
      %v225 = vld [vmem:[%s169 + $0x178] sm:$0xff]
      %v226 = vld [vmem:[%s169 + $0x180] sm:$0xff]
      %v227 = vld [vmem:[%s169 + $0x188] sm:$0xff]
      %v228 = vld [vmem:[%s169 + $0x190] sm:$0xff]
      %v229 = vld [vmem:[%s169 + $0x198] sm:$0xff]
      %v230 = vld [vmem:[%s169 + $0x1a0] sm:$0xff]
      %v231 = vld [vmem:[%s169 + $0x1a8] sm:$0xff]
      %v232 = vld [vmem:[%s169 + $0x1b0] sm:$0xff]
      %v233 = vld [vmem:[%s169 + $0x1b8] sm:$0xff]
      %v234 = vld [vmem:[%s169 + $0x1c0] sm:$0xff]
      %v235 = vld [vmem:[%s169 + $0x1c8] sm:$0xff]
      %v236 = vld [vmem:[%s169 + $0x1d0] sm:$0xff]
      %v237 = vld [vmem:[%s169 + $0x1d8] sm:$0xff]
      %v238 = vld [vmem:[%s169 + $0x1e0] sm:$0xff]
      %v239 = vld [vmem:[%s169 + $0x1e8] sm:$0xff]
      %v240 = vld [vmem:[%s169 + $0x1f0] sm:$0xff]
      %v241 = vld [vmem:[%s169 + $0x1f8] sm:$0xff]
      %v242 = vld [vmem:[%s169 + $0x200] sm:$0xff]
      %v243 = vld [vmem:[%s169 + $0x208] sm:$0xff]
      %v244 = vld [vmem:[%s169 + $0x210] sm:$0xff]
      %v245 = vld [vmem:[%s169 + $0x218] sm:$0xff]
      %v246 = vld [vmem:[%s169 + $0x220] sm:$0xff]
      %v247 = vld [vmem:[%s169 + $0x228] sm:$0xff]
      %v248 = vld [vmem:[%s169 + $0x230] sm:$0xff]
      %v249 = vld [vmem:[%s169 + $0x238] sm:$0xff]
      %v250 = vld [vmem:[%s169 + $0x240] sm:$0xff]
      %v251 = vld [vmem:[%s169 + $0x248] sm:$0xff]
      %v252 = vld [vmem:[%s169 + $0x250] sm:$0xff]
      %v253 = vld [vmem:[%s169 + $0x258] sm:$0xff]
      %v254 = vld [vmem:[%s169 + $0x260] sm:$0xff]
      %v255 = vld [vmem:[%s169 + $0x268] sm:$0xff]
      %v256 = vld [vmem:[%s169 + $0x270] sm:$0xff]
      %v257 = vld [vmem:[%s169 + $0x278] sm:$0xff]
      %v258 = vld [vmem:[%s169 + $0x280] sm:$0xff]
      %v259 = vld [vmem:[%s169 + $0x288] sm:$0xff]
      %v260 = vld [vmem:[%s169 + $0x290] sm:$0xff]
      %v261 = vld [vmem:[%s169 + $0x298] sm:$0xff]
      %v262 = vld [vmem:[%s169 + $0x2a0] sm:$0xff]
      %v263 = vld [vmem:[%s169 + $0x2a8] sm:$0xff]
      %v264 = vld [vmem:[%s169 + $0x2b0] sm:$0xff]
      %v265 = vld [vmem:[%s169 + $0x2b8] sm:$0xff]
      %v266 = vld [vmem:[%s169 + $0x2c0] sm:$0xff]
      %v267 = vld [vmem:[%s169 + $0x2c8] sm:$0xff]
      %v268 = vld [vmem:[%s1] sm:$0xf]
      %v269 = vld [vmem:[%s1 + $0x4] sm:$0xf]
      %v270 = vld [vmem:[%s1 + $0x8] sm:$0xf]
      %v271 = vld [vmem:[%s1 + $0xc] sm:$0xf]
      %v272 = vld [vmem:[%s1 + $0x10] sm:$0xf]
      %v273 = vld [vmem:[%s1 + $0x14] sm:$0xf]
      %v274 = vld [vmem:[%s1 + $0x18] sm:$0xf]
      %v275 = vld [vmem:[%s1 + $0x1c] sm:$0xf]
      %v276 = vld [vmem:[%s1 + $0x20] sm:$0xf]
      %v277 = vld [vmem:[%s1 + $0x24] sm:$0xf]
      %v278 = vld [vmem:[%s1 + $0x28] sm:$0xf]
      %v279 = vld [vmem:[%s1 + $0x2c] sm:$0xf]
      %v280 = vld [vmem:[%s1 + $0x30] sm:$0xf]
      %v281 = vld [vmem:[%s1 + $0x34] sm:$0xf]
      %v282 = vld [vmem:[%s1 + $0x38] sm:$0xf]
      %v283 = vld [vmem:[%s1 + $0x3c] sm:$0xf]
      %v284 = vld [vmem:[%s1 + $0x40] sm:$0xf]
      %v285 = vld [vmem:[%s1 + $0x44] sm:$0xf]
      %v286 = vld [vmem:[%s1 + $0x48] sm:$0xf]
      %v287 = vld [vmem:[%s1 + $0x4c] sm:$0xf]
      %v288 = vld [vmem:[%s1 + $0x50] sm:$0xf]
      %v289 = vld [vmem:[%s1 + $0x54] sm:$0xf]
      %v290 = vld [vmem:[%s1 + $0x58] sm:$0xf]
      %v291 = vld [vmem:[%s1 + $0x5c] sm:$0xf]
      %v292 = vld [vmem:[%s1 + $0x60] sm:$0xf]
      %v293 = vld [vmem:[%s1 + $0x64] sm:$0xf]
      %v294 = vld [vmem:[%s1 + $0x68] sm:$0xf]
      %v295 = vld [vmem:[%s1 + $0x6c] sm:$0xf]
      %v296 = vld [vmem:[%s1 + $0x70] sm:$0xf]
      %v297 = vld [vmem:[%s1 + $0x74] sm:$0xf]
      %v298 = vld [vmem:[%s1 + $0x78] sm:$0xf]
      %v299 = vld [vmem:[%s1 + $0x7c] sm:$0xf]
      %v300 = vld [vmem:[%s1 + $0x80] sm:$0xf]
      %v301 = vld [vmem:[%s1 + $0x84] sm:$0xf]
      %v302 = vld [vmem:[%s1 + $0x88] sm:$0xf]
      %v303 = vld [vmem:[%s1 + $0x8c] sm:$0xf]
      %v304 = vld [vmem:[%s1 + $0x90] sm:$0xf]
      %v305 = vld [vmem:[%s1 + $0x94] sm:$0xf]
      %v306 = vld [vmem:[%s1 + $0x98] sm:$0xf]
      %v307 = vld [vmem:[%s1 + $0x9c] sm:$0xf]
      %v308 = vld [vmem:[%s1 + $0xa0] sm:$0xf]
      %v309 = vld [vmem:[%s1 + $0xa4] sm:$0xf]
      %v310 = vld [vmem:[%s1 + $0xa8] sm:$0xf]
      %v311 = vld [vmem:[%s1 + $0xac] sm:$0xf]
      %v312 = vld [vmem:[%s1 + $0xb0] sm:$0xf]
      %v313 = vld [vmem:[%s1 + $0xb4] sm:$0xf]
      %v314 = vld [vmem:[%s1 + $0xb8] sm:$0xf]
      %v315 = vld [vmem:[%s1 + $0xbc] sm:$0xf]
      %v316 = vld [vmem:[%s1 + $0xc0] sm:$0xf]
      %v317 = vld [vmem:[%s1 + $0xc4] sm:$0xf]
      %v318 = vld [vmem:[%s1 + $0xc8] sm:$0xf]
      %v319 = vld [vmem:[%s1 + $0xcc] sm:$0xf]
      %v320 = vld [vmem:[%s1 + $0xd0] sm:$0xf]
      %v321 = vld [vmem:[%s1 + $0xd4] sm:$0xf]
      %v322 = vld [vmem:[%s1 + $0xd8] sm:$0xf]
      %v323 = vld [vmem:[%s1 + $0xdc] sm:$0xf]
      %v324 = vld [vmem:[%s1 + $0xe0] sm:$0xf]
      %v325 = vld [vmem:[%s1 + $0xe4] sm:$0xf]
      %v326 = vld [vmem:[%s1 + $0xe8] sm:$0xf]
      %v327 = vld [vmem:[%s1 + $0xec] sm:$0xf]
      %v328 = vld [vmem:[%s1 + $0xf0] sm:$0xf]
      %v329 = vld [vmem:[%s1 + $0xf4] sm:$0xf]
      %v330 = vld [vmem:[%s1 + $0xf8] sm:$0xf]
      %v331 = vld [vmem:[%s1 + $0xfc] sm:$0xf]
      %v332 = vld [vmem:[%s1 + $0x100] sm:$0xf]
      %v333 = vld [vmem:[%s1 + $0x104] sm:$0xf]
      %v334 = vld [vmem:[%s1 + $0x108] sm:$0xf]
      %v335 = vld [vmem:[%s1 + $0x10c] sm:$0xf]
      %v336 = vld [vmem:[%s1 + $0x110] sm:$0xf]
      %v337 = vld [vmem:[%s1 + $0x114] sm:$0xf]
      %v338 = vld [vmem:[%s1 + $0x118] sm:$0xf]
      %v339 = vld [vmem:[%s1 + $0x11c] sm:$0xf]
      %v340 = vld [vmem:[%s1 + $0x120] sm:$0xf]
      %v341 = vld [vmem:[%s1 + $0x124] sm:$0xf]
      %v342 = vld [vmem:[%s1 + $0x128] sm:$0xf]
      %v343 = vld [vmem:[%s1 + $0x12c] sm:$0xf]
      %v344 = vld [vmem:[%s1 + $0x130] sm:$0xf]
      %v345 = vld [vmem:[%s1 + $0x134] sm:$0xf]
      %v346 = vld [vmem:[%s1 + $0x138] sm:$0xf]
      %v347 = vld [vmem:[%s1 + $0x13c] sm:$0xf]
      %v348 = vld [vmem:[%s1 + $0x140] sm:$0xf]
      %v349 = vld [vmem:[%s1 + $0x144] sm:$0xf]
      %v350 = vld [vmem:[%s1 + $0x148] sm:$0xf]
      %v351 = vld [vmem:[%s1 + $0x14c] sm:$0xf]
      %v352 = vld [vmem:[%s1 + $0x150] sm:$0xf]
      %v353 = vld [vmem:[%s1 + $0x154] sm:$0xf]
      %v354 = vld [vmem:[%s1 + $0x158] sm:$0xf]
      %v355 = vld [vmem:[%s1 + $0x15c] sm:$0xf]
      %v356 = vld [vmem:[%s1 + $0x160] sm:$0xf]
      %v357 = vld [vmem:[%s1 + $0x164] sm:$0xf]
      %v358 = vld [vmem:[%s1 + $0x168] sm:$0xf]
      %v359 = vld [vmem:[%s1 + $0x16c] sm:$0xf]
      %v360 = vld [vmem:[%s1 + $0x170] sm:$0xf]
      %v361 = vld [vmem:[%s1 + $0x174] sm:$0xf]
      %v362 = vld [vmem:[%s1 + $0x178] sm:$0xf]
      %v363 = vld [vmem:[%s1 + $0x17c] sm:$0xf]
      %v364 = vld [vmem:[%s1 + $0x180] sm:$0xf]
      %v365 = vld [vmem:[%s1 + $0x184] sm:$0xf]
      %v366 = vld [vmem:[%s1 + $0x188] sm:$0xf]
      %v367 = vld [vmem:[%s1 + $0x18c] sm:$0xf]
      %v368 = vld [vmem:[%s1 + $0x190] sm:$0xf]
      %v369 = vld [vmem:[%s1 + $0x194] sm:$0xf]
      %v370 = vld [vmem:[%s1 + $0x198] sm:$0xf]
      %v371 = vld [vmem:[%s1 + $0x19c] sm:$0xf]
      %v372 = vld [vmem:[%s1 + $0x1a0] sm:$0xf]
      %v373 = vld [vmem:[%s1 + $0x1a4] sm:$0xf]
      %v374 = vld [vmem:[%s1 + $0x1a8] sm:$0xf]
      %v375 = vld [vmem:[%s1 + $0x1ac] sm:$0xf]
      %v376 = vld [vmem:[%s1 + $0x1b0] sm:$0xf]
      %v377 = vld [vmem:[%s1 + $0x1b4] sm:$0xf]
      %v378 = vld [vmem:[%s1 + $0x1b8] sm:$0xf]
      %v379 = vld [vmem:[%s1 + $0x1bc] sm:$0xf]
      %v380 = vld [vmem:[%s1 + $0x1c0] sm:$0xf]
      %v381 = vld [vmem:[%s1 + $0x1c4] sm:$0xf]
      %v382 = vld [vmem:[%s1 + $0x1c8] sm:$0xf]
      %v383 = vld [vmem:[%s1 + $0x1cc] sm:$0xf]
      %v384 = vld [vmem:[%s1 + $0x1d0] sm:$0xf]
      %v385 = vld [vmem:[%s1 + $0x1d4] sm:$0xf]
      %v386 = vld [vmem:[%s1 + $0x1d8] sm:$0xf]
      %v387 = vld [vmem:[%s1 + $0x1dc] sm:$0xf]
      %v388 = vld [vmem:[%s1 + $0x1e0] sm:$0xf]
      %v389 = vld [vmem:[%s1 + $0x1e4] sm:$0xf]
      %v390 = vld [vmem:[%s1 + $0x1e8] sm:$0xf]
      %v391 = vld [vmem:[%s1 + $0x1ec] sm:$0xf]
      %v392 = vld [vmem:[%s1 + $0x1f0] sm:$0xf]
      %v393 = vld [vmem:[%s1 + $0x1f4] sm:$0xf]
      %v394 = vld [vmem:[%s1 + $0x1f8] sm:$0xf]
      %v395 = vld [vmem:[%s1 + $0x1fc] sm:$0xf]
      %v396 = vld [vmem:[%s1 + $0x200] sm:$0xf]
      %v397 = vld [vmem:[%s1 + $0x204] sm:$0xf]
      %v398 = vld [vmem:[%s1 + $0x208] sm:$0xf]
      %v399 = vld [vmem:[%s1 + $0x20c] sm:$0xf]
      %v400 = vld [vmem:[%s1 + $0x210] sm:$0xf]
      %v401 = vld [vmem:[%s1 + $0x214] sm:$0xf]
      %v402 = vld [vmem:[%s1 + $0x218] sm:$0xf]
      %v403 = vld [vmem:[%s1 + $0x21c] sm:$0xf]
      %v404 = vld [vmem:[%s1 + $0x220] sm:$0xf]
      %v405 = vld [vmem:[%s1 + $0x224] sm:$0xf]
      %v406 = vld [vmem:[%s1 + $0x228] sm:$0xf]
      %v407 = vld [vmem:[%s1 + $0x22c] sm:$0xf]
      %v408 = vld [vmem:[%s1 + $0x230] sm:$0xf]
      %v409 = vld [vmem:[%s1 + $0x234] sm:$0xf]
      %v410 = vld [vmem:[%s1 + $0x238] sm:$0xf]
      %v411 = vld [vmem:[%s1 + $0x23c] sm:$0xf]
      %v412 = vld [vmem:[%s1 + $0x240] sm:$0x3]
      %v413 = vld [vmem:[%s2] sm:$0x1]
      %v415 = vperm.slane %v413, 0
      %v507 = vunpack.c.l.b16 %v178
      %v508 = vunpack.c.h.b16 %v178
      %v509 = vunpack.c.l.b16 %v179
      %v510 = vunpack.c.h.b16 %v179
      %v511 = vunpack.c.l.b16 %v180
      %v512 = vunpack.c.h.b16 %v180
      %v513 = vunpack.c.l.b16 %v181
      %v514 = vunpack.c.h.b16 %v181
      %v515 = vunpack.c.l.b16 %v182
      %v516 = vunpack.c.h.b16 %v182
      %v517 = vunpack.c.l.b16 %v183
      %v518 = vunpack.c.h.b16 %v183
      %v519 = vunpack.c.l.b16 %v184
      %v520 = vunpack.c.h.b16 %v184
      %v521 = vunpack.c.l.b16 %v185
      %v522 = vunpack.c.h.b16 %v185
      %v523 = vunpack.c.l.b16 %v186
      %v524 = vunpack.c.h.b16 %v186
      %v525 = vunpack.c.l.b16 %v187
      %v526 = vunpack.c.h.b16 %v187
      %v527 = vunpack.c.l.b16 %v188
      %v528 = vunpack.c.h.b16 %v188
      %v529 = vunpack.c.l.b16 %v189
      %v530 = vunpack.c.h.b16 %v189
      %v531 = vunpack.c.l.b16 %v190
      %v532 = vunpack.c.h.b16 %v190
      %v533 = vunpack.c.l.b16 %v191
      %v534 = vunpack.c.h.b16 %v191
      %v535 = vunpack.c.l.b16 %v192
      %v536 = vunpack.c.h.b16 %v192
      %v537 = vunpack.c.l.b16 %v193
      %v538 = vunpack.c.h.b16 %v193
      %v539 = vunpack.c.l.b16 %v194
      %v540 = vunpack.c.h.b16 %v194
      %v541 = vunpack.c.l.b16 %v195
      %v542 = vunpack.c.h.b16 %v195
      %v543 = vunpack.c.l.b16 %v196
      %v544 = vunpack.c.h.b16 %v196
      %v545 = vunpack.c.l.b16 %v197
      %v546 = vunpack.c.h.b16 %v197
      %v547 = vunpack.c.l.b16 %v198
      %v548 = vunpack.c.h.b16 %v198
      %v549 = vunpack.c.l.b16 %v199
      %v550 = vunpack.c.h.b16 %v199
      %v551 = vunpack.c.l.b16 %v200
      %v552 = vunpack.c.h.b16 %v200
      %v553 = vunpack.c.l.b16 %v201
      %v554 = vunpack.c.h.b16 %v201
      %v555 = vunpack.c.l.b16 %v202
      %v556 = vunpack.c.h.b16 %v202
      %v557 = vunpack.c.l.b16 %v203
      %v558 = vunpack.c.h.b16 %v203
      %v559 = vunpack.c.l.b16 %v204
      %v560 = vunpack.c.h.b16 %v204
      %v561 = vunpack.c.l.b16 %v205
      %v562 = vunpack.c.h.b16 %v205
      %v563 = vunpack.c.l.b16 %v206
      %v564 = vunpack.c.h.b16 %v206
      %v565 = vunpack.c.l.b16 %v207
      %v566 = vunpack.c.h.b16 %v207
      %v567 = vunpack.c.l.b16 %v208
      %v568 = vunpack.c.h.b16 %v208
      %v569 = vunpack.c.l.b16 %v209
      %v570 = vunpack.c.h.b16 %v209
      %v571 = vunpack.c.l.b16 %v210
      %v572 = vunpack.c.h.b16 %v210
      %v573 = vunpack.c.l.b16 %v211
      %v574 = vunpack.c.h.b16 %v211
      %v575 = vunpack.c.l.b16 %v212
      %v576 = vunpack.c.h.b16 %v212
      %v577 = vunpack.c.l.b16 %v213
      %v578 = vunpack.c.h.b16 %v213
      %v579 = vunpack.c.l.b16 %v214
      %v580 = vunpack.c.h.b16 %v214
      %v581 = vunpack.c.l.b16 %v215
      %v582 = vunpack.c.h.b16 %v215
      %v583 = vunpack.c.l.b16 %v216
      %v584 = vunpack.c.h.b16 %v216
      %v585 = vunpack.c.l.b16 %v217
      %v586 = vunpack.c.h.b16 %v217
      %v587 = vunpack.c.l.b16 %v218
      %v588 = vunpack.c.h.b16 %v218
      %v589 = vunpack.c.l.b16 %v219
      %v590 = vunpack.c.h.b16 %v219
      %v591 = vunpack.c.l.b16 %v220
      %v592 = vunpack.c.h.b16 %v220
      %v593 = vunpack.c.l.b16 %v221
      %v594 = vunpack.c.h.b16 %v221
      %v595 = vunpack.c.l.b16 %v222
      %v596 = vunpack.c.h.b16 %v222
      %v597 = vunpack.c.l.b16 %v223
      %v598 = vunpack.c.h.b16 %v223
      %v599 = vunpack.c.l.b16 %v224
      %v600 = vunpack.c.h.b16 %v224
      %v601 = vunpack.c.l.b16 %v225
      %v602 = vunpack.c.h.b16 %v225
      %v603 = vunpack.c.l.b16 %v226
      %v604 = vunpack.c.h.b16 %v226
      %v605 = vunpack.c.l.b16 %v227
      %v606 = vunpack.c.h.b16 %v227
      %v607 = vunpack.c.l.b16 %v228
      %v608 = vunpack.c.h.b16 %v228
      %v609 = vunpack.c.l.b16 %v229
      %v610 = vunpack.c.h.b16 %v229
      %v611 = vunpack.c.l.b16 %v230
      %v612 = vunpack.c.h.b16 %v230
      %v613 = vunpack.c.l.b16 %v231
      %v614 = vunpack.c.h.b16 %v231
      %v615 = vunpack.c.l.b16 %v232
      %v616 = vunpack.c.h.b16 %v232
      %v617 = vunpack.c.l.b16 %v233
      %v618 = vunpack.c.h.b16 %v233
      %v619 = vunpack.c.l.b16 %v234
      %v620 = vunpack.c.h.b16 %v234
      %v621 = vunpack.c.l.b16 %v235
      %v622 = vunpack.c.h.b16 %v235
      %v623 = vunpack.c.l.b16 %v236
      %v624 = vunpack.c.h.b16 %v236
      %v625 = vunpack.c.l.b16 %v237
      %v626 = vunpack.c.h.b16 %v237
      %v627 = vunpack.c.l.b16 %v238
      %v628 = vunpack.c.h.b16 %v238
      %v629 = vunpack.c.l.b16 %v239
      %v630 = vunpack.c.h.b16 %v239
      %v631 = vunpack.c.l.b16 %v240
      %v632 = vunpack.c.h.b16 %v240
      %v633 = vunpack.c.l.b16 %v241
      %v634 = vunpack.c.h.b16 %v241
      %v635 = vunpack.c.l.b16 %v242
      %v636 = vunpack.c.h.b16 %v242
      %v637 = vunpack.c.l.b16 %v243
      %v638 = vunpack.c.h.b16 %v243
      %v639 = vunpack.c.l.b16 %v244
      %v640 = vunpack.c.h.b16 %v244
      %v641 = vunpack.c.l.b16 %v245
      %v642 = vunpack.c.h.b16 %v245
      %v643 = vunpack.c.l.b16 %v246
      %v644 = vunpack.c.h.b16 %v246
      %v645 = vunpack.c.l.b16 %v247
      %v646 = vunpack.c.h.b16 %v247
      %v647 = vunpack.c.l.b16 %v248
      %v648 = vunpack.c.h.b16 %v248
      %v649 = vunpack.c.l.b16 %v249
      %v650 = vunpack.c.h.b16 %v249
      %v651 = vunpack.c.l.b16 %v250
      %v652 = vunpack.c.h.b16 %v250
      %v653 = vunpack.c.l.b16 %v251
      %v654 = vunpack.c.h.b16 %v251
      %v655 = vunpack.c.l.b16 %v252
      %v656 = vunpack.c.h.b16 %v252
      %v657 = vunpack.c.l.b16 %v253
      %v658 = vunpack.c.h.b16 %v253
      %v659 = vunpack.c.l.b16 %v254
      %v660 = vunpack.c.h.b16 %v254
      %v661 = vunpack.c.l.b16 %v255
      %v662 = vunpack.c.h.b16 %v255
      %v663 = vunpack.c.l.b16 %v256
      %v664 = vunpack.c.h.b16 %v256
      %v665 = vunpack.c.l.b16 %v257
      %v666 = vunpack.c.h.b16 %v257
      %v667 = vunpack.c.l.b16 %v258
      %v668 = vunpack.c.h.b16 %v258
      %v669 = vunpack.c.l.b16 %v259
      %v670 = vunpack.c.h.b16 %v259
      %v671 = vunpack.c.l.b16 %v260
      %v672 = vunpack.c.h.b16 %v260
      %v673 = vunpack.c.l.b16 %v261
      %v674 = vunpack.c.h.b16 %v261
      %v675 = vunpack.c.l.b16 %v262
      %v676 = vunpack.c.h.b16 %v262
      %v677 = vunpack.c.l.b16 %v263
      %v678 = vunpack.c.h.b16 %v263
      %v679 = vunpack.c.l.b16 %v264
      %v680 = vunpack.c.h.b16 %v264
      %v681 = vunpack.c.l.b16 %v265
      %v682 = vunpack.c.h.b16 %v265
      %v683 = vunpack.c.l.b16 %v266
      %v684 = vunpack.c.h.b16 %v266
      %v685 = vunpack.c.l.b16 %v267
      %v686 = vunpack.c.h.b16 %v267
      %v687 = vpack.c.b16 %v517, %v507
      %v688 = vpack.c.b16 %v518, %v508
      %v689 = vpack.c.b16 %v519, %v509
      %v690 = vpack.c.b16 %v520, %v510
      %v691 = vpack.c.b16 %v521, %v511
      %v692 = vpack.c.b16 %v522, %v512
      %v693 = vpack.c.b16 %v523, %v513
      %v694 = vpack.c.b16 %v524, %v514
      %v695 = vpack.c.b16 %v525, %v515
      %v696 = vpack.c.b16 %v526, %v516
      %v697 = vpack.c.b16 %v537, %v527
      %v698 = vpack.c.b16 %v538, %v528
      %v699 = vpack.c.b16 %v539, %v529
      %v700 = vpack.c.b16 %v540, %v530
      %v701 = vpack.c.b16 %v541, %v531
      %v702 = vpack.c.b16 %v542, %v532
      %v703 = vpack.c.b16 %v543, %v533
      %v704 = vpack.c.b16 %v544, %v534
      %v705 = vpack.c.b16 %v545, %v535
      %v706 = vpack.c.b16 %v546, %v536
      %v707 = vpack.c.b16 %v557, %v547
      %v708 = vpack.c.b16 %v558, %v548
      %v709 = vpack.c.b16 %v559, %v549
      %v710 = vpack.c.b16 %v560, %v550
      %v711 = vpack.c.b16 %v561, %v551
      %v712 = vpack.c.b16 %v562, %v552
      %v713 = vpack.c.b16 %v563, %v553
      %v714 = vpack.c.b16 %v564, %v554
      %v715 = vpack.c.b16 %v565, %v555
      %v716 = vpack.c.b16 %v566, %v556
      %v717 = vpack.c.b16 %v577, %v567
      %v718 = vpack.c.b16 %v578, %v568
      %v719 = vpack.c.b16 %v579, %v569
      %v720 = vpack.c.b16 %v580, %v570
      %v721 = vpack.c.b16 %v581, %v571
      %v722 = vpack.c.b16 %v582, %v572
      %v723 = vpack.c.b16 %v583, %v573
      %v724 = vpack.c.b16 %v584, %v574
      %v725 = vpack.c.b16 %v585, %v575
      %v726 = vpack.c.b16 %v586, %v576
      %v727 = vpack.c.b16 %v597, %v587
      %v728 = vpack.c.b16 %v598, %v588
      %v729 = vpack.c.b16 %v599, %v589
      %v730 = vpack.c.b16 %v600, %v590
      %v731 = vpack.c.b16 %v601, %v591
      %v732 = vpack.c.b16 %v602, %v592
      %v733 = vpack.c.b16 %v603, %v593
      %v734 = vpack.c.b16 %v604, %v594
      %v735 = vpack.c.b16 %v605, %v595
      %v736 = vpack.c.b16 %v606, %v596
      %v737 = vpack.c.b16 %v617, %v607
      %v738 = vpack.c.b16 %v618, %v608
      %v739 = vpack.c.b16 %v619, %v609
      %v740 = vpack.c.b16 %v620, %v610
      %v741 = vpack.c.b16 %v621, %v611
      %v742 = vpack.c.b16 %v622, %v612
      %v743 = vpack.c.b16 %v623, %v613
      %v744 = vpack.c.b16 %v624, %v614
      %v745 = vpack.c.b16 %v625, %v615
      %v746 = vpack.c.b16 %v626, %v616
      %v747 = vpack.c.b16 %v637, %v627
      %v748 = vpack.c.b16 %v638, %v628
      %v749 = vpack.c.b16 %v639, %v629
      %v750 = vpack.c.b16 %v640, %v630
      %v751 = vpack.c.b16 %v641, %v631
      %v752 = vpack.c.b16 %v642, %v632
      %v753 = vpack.c.b16 %v643, %v633
      %v754 = vpack.c.b16 %v644, %v634
      %v755 = vpack.c.b16 %v645, %v635
      %v756 = vpack.c.b16 %v646, %v636
      %v757 = vpack.c.b16 %v657, %v647
      %v758 = vpack.c.b16 %v658, %v648
      %v759 = vpack.c.b16 %v659, %v649
      %v760 = vpack.c.b16 %v660, %v650
      %v761 = vpack.c.b16 %v661, %v651
      %v762 = vpack.c.b16 %v662, %v652
      %v763 = vpack.c.b16 %v663, %v653
      %v764 = vpack.c.b16 %v664, %v654
      %v765 = vpack.c.b16 %v665, %v655
      %v766 = vpack.c.b16 %v666, %v656
      %v767 = vpack.c.b16 %v677, %v667
      %v768 = vpack.c.b16 %v678, %v668
      %v769 = vpack.c.b16 %v679, %v669
      %v770 = vpack.c.b16 %v680, %v670
      %v771 = vpack.c.b16 %v681, %v671
      %v772 = vpack.c.b16 %v682, %v672
      %v773 = vpack.c.b16 %v683, %v673
      %v774 = vpack.c.b16 %v684, %v674
      %v775 = vpack.c.b16 %v685, %v675
      %v776 = vpack.c.b16 %v686, %v676
      %v1003 = vunpack.c.l.b16 %v268
      %v1004 = vunpack.c.l.b16 %v269
      %v1005 = vunpack.c.l.b16 %v270
      %v1006 = vunpack.c.l.b16 %v271
      %v1007 = vunpack.c.l.b16 %v272
      %v1008 = vunpack.c.l.b16 %v273
      %v1009 = vunpack.c.l.b16 %v274
      %v1010 = vunpack.c.l.b16 %v275
      %v1011 = vunpack.c.l.b16 %v276
      %v1012 = vunpack.c.l.b16 %v277
      %v1013 = vunpack.c.l.b16 %v278
      %v1014 = vunpack.c.l.b16 %v279
      %v1015 = vunpack.c.l.b16 %v280
      %v1016 = vunpack.c.l.b16 %v281
      %v1017 = vunpack.c.l.b16 %v282
      %v1018 = vunpack.c.l.b16 %v283
      %v1019 = vunpack.c.l.b16 %v284
      %v1020 = vunpack.c.l.b16 %v285
      %v1021 = vunpack.c.l.b16 %v286
      %v1022 = vunpack.c.l.b16 %v287
      %v1023 = vunpack.c.l.b16 %v288
      %v1024 = vunpack.c.l.b16 %v289
      %v1025 = vunpack.c.l.b16 %v290
      %v1026 = vunpack.c.l.b16 %v291
      %v1027 = vunpack.c.l.b16 %v292
      %v1028 = vunpack.c.l.b16 %v293
      %v1029 = vunpack.c.l.b16 %v294
      %v1030 = vunpack.c.l.b16 %v295
      %v1031 = vunpack.c.l.b16 %v296
      %v1032 = vunpack.c.l.b16 %v297
      %v1033 = vunpack.c.l.b16 %v298
      %v1034 = vunpack.c.l.b16 %v299
      %v1035 = vunpack.c.l.b16 %v300
      %v1036 = vunpack.c.l.b16 %v301
      %v1037 = vunpack.c.l.b16 %v302
      %v1038 = vunpack.c.l.b16 %v303
      %v1039 = vunpack.c.l.b16 %v304
      %v1040 = vunpack.c.l.b16 %v305
      %v1041 = vunpack.c.l.b16 %v306
      %v1042 = vunpack.c.l.b16 %v307
      %v1043 = vunpack.c.l.b16 %v308
      %v1044 = vunpack.c.l.b16 %v309
      %v1045 = vunpack.c.l.b16 %v310
      %v1046 = vunpack.c.l.b16 %v311
      %v1047 = vunpack.c.l.b16 %v312
      %v1048 = vunpack.c.l.b16 %v313
      %v1049 = vunpack.c.l.b16 %v314
      %v1050 = vunpack.c.l.b16 %v315
      %v1051 = vunpack.c.l.b16 %v316
      %v1052 = vunpack.c.l.b16 %v317
      %v1053 = vunpack.c.l.b16 %v318
      %v1054 = vunpack.c.l.b16 %v319
      %v1055 = vunpack.c.l.b16 %v320
      %v1056 = vunpack.c.l.b16 %v321
      %v1057 = vunpack.c.l.b16 %v322
      %v1058 = vunpack.c.l.b16 %v323
      %v1059 = vunpack.c.l.b16 %v324
      %v1060 = vunpack.c.l.b16 %v325
      %v1061 = vunpack.c.l.b16 %v326
      %v1062 = vunpack.c.l.b16 %v327
      %v1063 = vunpack.c.l.b16 %v328
      %v1064 = vunpack.c.l.b16 %v329
      %v1065 = vunpack.c.l.b16 %v330
      %v1066 = vunpack.c.l.b16 %v331
      %v1067 = vunpack.c.l.b16 %v332
      %v1068 = vunpack.c.l.b16 %v333
      %v1069 = vunpack.c.l.b16 %v334
      %v1070 = vunpack.c.l.b16 %v335
      %v1071 = vunpack.c.l.b16 %v336
      %v1072 = vunpack.c.l.b16 %v337
      %v1073 = vunpack.c.l.b16 %v338
      %v1074 = vunpack.c.l.b16 %v339
      %v1075 = vunpack.c.l.b16 %v340
      %v1076 = vunpack.c.l.b16 %v341
      %v1077 = vunpack.c.l.b16 %v342
      %v1078 = vunpack.c.l.b16 %v343
      %v1079 = vunpack.c.l.b16 %v344
      %v1080 = vunpack.c.l.b16 %v345
      %v1081 = vunpack.c.l.b16 %v346
      %v1082 = vunpack.c.l.b16 %v347
      %v1083 = vunpack.c.l.b16 %v348
      %v1084 = vunpack.c.l.b16 %v349
      %v1085 = vunpack.c.l.b16 %v350
      %v1086 = vunpack.c.l.b16 %v351
      %v1087 = vunpack.c.l.b16 %v352
      %v1088 = vunpack.c.l.b16 %v353
      %v1089 = vunpack.c.l.b16 %v354
      %v1090 = vunpack.c.l.b16 %v355
      %v1091 = vunpack.c.l.b16 %v356
      %v1092 = vunpack.c.l.b16 %v357
      %v1093 = vunpack.c.l.b16 %v358
      %v1094 = vunpack.c.l.b16 %v359
      %v1095 = vunpack.c.l.b16 %v360
      %v1096 = vunpack.c.l.b16 %v361
      %v1097 = vunpack.c.l.b16 %v362
      %v1098 = vunpack.c.l.b16 %v363
      %v1099 = vunpack.c.l.b16 %v364
      %v1100 = vunpack.c.l.b16 %v365
      %v1101 = vunpack.c.l.b16 %v366
      %v1102 = vunpack.c.l.b16 %v367
      %v1103 = vunpack.c.l.b16 %v368
      %v1104 = vunpack.c.l.b16 %v369
      %v1105 = vunpack.c.l.b16 %v370
      %v1106 = vunpack.c.l.b16 %v371
      %v1107 = vunpack.c.l.b16 %v372
      %v1108 = vunpack.c.l.b16 %v373
      %v1109 = vunpack.c.l.b16 %v374
      %v1110 = vunpack.c.l.b16 %v375
      %v1111 = vunpack.c.l.b16 %v376
      %v1112 = vunpack.c.l.b16 %v377
      %v1113 = vunpack.c.l.b16 %v378
      %v1114 = vunpack.c.l.b16 %v379
      %v1115 = vunpack.c.l.b16 %v380
      %v1116 = vunpack.c.l.b16 %v381
      %v1117 = vunpack.c.l.b16 %v382
      %v1118 = vunpack.c.l.b16 %v383
      %v1119 = vunpack.c.l.b16 %v384
      %v1120 = vunpack.c.l.b16 %v385
      %v1121 = vunpack.c.l.b16 %v386
      %v1122 = vunpack.c.l.b16 %v387
      %v1123 = vunpack.c.l.b16 %v388
      %v1124 = vunpack.c.l.b16 %v389
      %v1125 = vunpack.c.l.b16 %v390
      %v1126 = vunpack.c.l.b16 %v391
      %v1127 = vunpack.c.l.b16 %v392
      %v1128 = vunpack.c.l.b16 %v393
      %v1129 = vunpack.c.l.b16 %v394
      %v1130 = vunpack.c.l.b16 %v395
      %v1131 = vunpack.c.l.b16 %v396
      %v1132 = vunpack.c.l.b16 %v397
      %v1133 = vunpack.c.l.b16 %v398
      %v1134 = vunpack.c.l.b16 %v399
      %v1135 = vunpack.c.l.b16 %v400
      %v1136 = vunpack.c.l.b16 %v401
      %v1137 = vunpack.c.l.b16 %v402
      %v1138 = vunpack.c.l.b16 %v403
      %v1139 = vunpack.c.l.b16 %v404
      %v1140 = vunpack.c.l.b16 %v405
      %v1141 = vunpack.c.l.b16 %v406
      %v1142 = vunpack.c.l.b16 %v407
      %v1143 = vunpack.c.l.b16 %v408
      %v1144 = vunpack.c.l.b16 %v409
      %v1145 = vunpack.c.l.b16 %v410
      %v1146 = vunpack.c.l.b16 %v411
      %v1147 = vunpack.c.l.b16 %v412
      %v1148 = vpack.c.b16 %v1004, %v1003
      %v1149 = vpack.c.b16 %v1006, %v1005
      %v1150 = vpack.c.b16 %v1008, %v1007
      %v1151 = vpack.c.b16 %v1010, %v1009
      %v1152 = vpack.c.b16 %v1012, %v1011
      %v1153 = vpack.c.b16 %v1014, %v1013
      %v1154 = vpack.c.b16 %v1016, %v1015
      %v1155 = vpack.c.b16 %v1018, %v1017
      %v1156 = vpack.c.b16 %v1020, %v1019
      %v1157 = vpack.c.b16 %v1022, %v1021
      %v1158 = vpack.c.b16 %v1024, %v1023
      %v1159 = vpack.c.b16 %v1026, %v1025
      %v1160 = vpack.c.b16 %v1028, %v1027
      %v1161 = vpack.c.b16 %v1030, %v1029
      %v1162 = vpack.c.b16 %v1032, %v1031
      %v1163 = vpack.c.b16 %v1034, %v1033
      %v1164 = vpack.c.b16 %v1036, %v1035
      %v1165 = vpack.c.b16 %v1038, %v1037
      %v1166 = vpack.c.b16 %v1040, %v1039
      %v1167 = vpack.c.b16 %v1042, %v1041
      %v1168 = vpack.c.b16 %v1044, %v1043
      %v1169 = vpack.c.b16 %v1046, %v1045
      %v1170 = vpack.c.b16 %v1048, %v1047
      %v1171 = vpack.c.b16 %v1050, %v1049
      %v1172 = vpack.c.b16 %v1052, %v1051
      %v1173 = vpack.c.b16 %v1054, %v1053
      %v1174 = vpack.c.b16 %v1056, %v1055
      %v1175 = vpack.c.b16 %v1058, %v1057
      %v1176 = vpack.c.b16 %v1060, %v1059
      %v1177 = vpack.c.b16 %v1062, %v1061
      %v1178 = vpack.c.b16 %v1064, %v1063
      %v1179 = vpack.c.b16 %v1066, %v1065
      %v1180 = vpack.c.b16 %v1068, %v1067
      %v1181 = vpack.c.b16 %v1070, %v1069
      %v1182 = vpack.c.b16 %v1072, %v1071
      %v1183 = vpack.c.b16 %v1074, %v1073
      %v1184 = vpack.c.b16 %v1076, %v1075
      %v1185 = vpack.c.b16 %v1078, %v1077
      %v1186 = vpack.c.b16 %v1080, %v1079
      %v1187 = vpack.c.b16 %v1082, %v1081
      %v1188 = vpack.c.b16 %v1084, %v1083
      %v1189 = vpack.c.b16 %v1086, %v1085
      %v1190 = vpack.c.b16 %v1088, %v1087
      %v1191 = vpack.c.b16 %v1090, %v1089
      %v1192 = vpack.c.b16 %v1092, %v1091
      %v1193 = vpack.c.b16 %v1094, %v1093
      %v1194 = vpack.c.b16 %v1096, %v1095
      %v1195 = vpack.c.b16 %v1098, %v1097
      %v1196 = vpack.c.b16 %v1100, %v1099
      %v1197 = vpack.c.b16 %v1102, %v1101
      %v1198 = vpack.c.b16 %v1104, %v1103
      %v1199 = vpack.c.b16 %v1106, %v1105
      %v1200 = vpack.c.b16 %v1108, %v1107
      %v1201 = vpack.c.b16 %v1110, %v1109
      %v1202 = vpack.c.b16 %v1112, %v1111
      %v1203 = vpack.c.b16 %v1114, %v1113
      %v1204 = vpack.c.b16 %v1116, %v1115
      %v1205 = vpack.c.b16 %v1118, %v1117
      %v1206 = vpack.c.b16 %v1120, %v1119
      %v1207 = vpack.c.b16 %v1122, %v1121
      %v1208 = vpack.c.b16 %v1124, %v1123
      %v1209 = vpack.c.b16 %v1126, %v1125
      %v1210 = vpack.c.b16 %v1128, %v1127
      %v1211 = vpack.c.b16 %v1130, %v1129
      %v1212 = vpack.c.b16 %v1132, %v1131
      %v1213 = vpack.c.b16 %v1134, %v1133
      %v1214 = vpack.c.b16 %v1136, %v1135
      %v1215 = vpack.c.b16 %v1138, %v1137
      %v1216 = vpack.c.b16 %v1140, %v1139
      %v1217 = vpack.c.b16 %v1142, %v1141
      %v1218 = vpack.c.b16 %v1144, %v1143
      %v1219 = vpack.c.b16 %v1146, %v1145
      %v1220 = vpack.c.b16 %v1147, %v1147
      %vm1293 = vcmask 31744
      %v1295 = vsel %vm1293, %v696, 0
      %v1298 = vsel %vm1293, %v706, 0
      %v1301 = vsel %vm1293, %v716, 0
      %v1304 = vsel %vm1293, %v726, 0
      %v1307 = vsel %vm1293, %v736, 0
      %v1310 = vsel %vm1293, %v746, 0
      %v1313 = vsel %vm1293, %v756, 0
      %v1316 = vsel %vm1293, %v766, 0
      %v1319 = vsel %vm1293, %v776, 0
      %vm1321 = vcmask 1041408
      %v1323 = vsel %vm1321, %v1220, 0
      %1325 = vmatpush.bf16.msra.mxu0 %v1155
      %1326 = vmatpush.bf16.msra.mxu0 %v1154
      %1327 = vmatpush.bf16.msra.mxu0 %v1153
      %1328 = vmatpush.bf16.msra.mxu0 %v1152
      %1329 = vmatpush.bf16.msra.mxu0 %v1151
      %1330 = vmatpush.bf16.msra.mxu0 %v1150
      %1331 = vmatpush.bf16.msra.mxu0 %v1149
      %1332 = vmatpush.bf16.msra.mxu0 %v1148
      %1333 = vmatmul.bf16.gmra.mxu0 %v687
      %v1334 = vpop.f32.mrf.mxu0
      %v1335 = vadd.f32 %v415, %v1334
      %v1336 = vpop.f32.mrf.mxu0
      %v1337 = vadd.f32 %v415, %v1336
      %1338 = vmatmul.bf16.gmra.mxu0 %v697
      %v1339 = vpop.f32.mrf.mxu0
      %v1340 = vadd.f32 %v415, %v1339
      %v1341 = vpop.f32.mrf.mxu0
      %v1342 = vadd.f32 %v415, %v1341
      %1343 = vmatmul.bf16.gmra.mxu0 %v707
      %v1344 = vpop.f32.mrf.mxu0
      %v1345 = vadd.f32 %v415, %v1344
      %v1346 = vpop.f32.mrf.mxu0
      %v1347 = vadd.f32 %v415, %v1346
      %1348 = vmatmul.bf16.gmra.mxu0 %v717
      %v1349 = vpop.f32.mrf.mxu0
      %v1350 = vadd.f32 %v415, %v1349
      %v1351 = vpop.f32.mrf.mxu0
      %v1352 = vadd.f32 %v415, %v1351
      %1353 = vmatmul.bf16.gmra.mxu0 %v727
      %v1354 = vpop.f32.mrf.mxu0
      %v1355 = vadd.f32 %v415, %v1354
      %v1356 = vpop.f32.mrf.mxu0
      %v1357 = vadd.f32 %v415, %v1356
      %1358 = vmatmul.bf16.gmra.mxu0 %v737
      %v1359 = vpop.f32.mrf.mxu0
      %v1360 = vadd.f32 %v415, %v1359
      %v1361 = vpop.f32.mrf.mxu0
      %v1362 = vadd.f32 %v415, %v1361
      %1363 = vmatmul.bf16.gmra.mxu0 %v747
      %v1364 = vpop.f32.mrf.mxu0
      %v1365 = vadd.f32 %v415, %v1364
      %v1366 = vpop.f32.mrf.mxu0
      %v1367 = vadd.f32 %v415, %v1366
      %1368 = vmatmul.bf16.gmra.mxu0 %v757
      %v1369 = vpop.f32.mrf.mxu0
      %v1370 = vadd.f32 %v415, %v1369
      %v1371 = vpop.f32.mrf.mxu0
      %v1372 = vadd.f32 %v415, %v1371
      %1373 = vmatmul.bf16.gmra.mxu0 %v767
      %v1374 = vpop.f32.mrf.mxu0
      %v1375 = vadd.f32 %v415, %v1374
      %v1376 = vpop.f32.mrf.mxu0
      %v1377 = vadd.f32 %v415, %v1376
      %1378 = vdwg.mxu0
      %1379 = vmatpush.bf16.msra.mxu0 %v1163
      %1380 = vmatpush.bf16.msra.mxu0 %v1162
      %1381 = vmatpush.bf16.msra.mxu0 %v1161
      %1382 = vmatpush.bf16.msra.mxu0 %v1160
      %1383 = vmatpush.bf16.msra.mxu0 %v1159
      %1384 = vmatpush.bf16.msra.mxu0 %v1158
      %1385 = vmatpush.bf16.msra.mxu0 %v1157
      %1386 = vmatpush.bf16.msra.mxu0 %v1156
      %1387 = vmatmul.bf16.gmra.mxu0 %v688
      %v1388 = vpop.f32.mrf.mxu0
      %v1389 = vadd.f32 %v1335, %v1388
      %v1390 = vpop.f32.mrf.mxu0
      %v1391 = vadd.f32 %v1337, %v1390
      %1392 = vmatmul.bf16.gmra.mxu0 %v698
      %v1393 = vpop.f32.mrf.mxu0
      %v1394 = vadd.f32 %v1340, %v1393
      %v1395 = vpop.f32.mrf.mxu0
      %v1396 = vadd.f32 %v1342, %v1395
      %1397 = vmatmul.bf16.gmra.mxu0 %v708
      %v1398 = vpop.f32.mrf.mxu0
      %v1399 = vadd.f32 %v1345, %v1398
      %v1400 = vpop.f32.mrf.mxu0
      %v1401 = vadd.f32 %v1347, %v1400
      %1402 = vmatmul.bf16.gmra.mxu0 %v718
      %v1403 = vpop.f32.mrf.mxu0
      %v1404 = vadd.f32 %v1350, %v1403
      %v1405 = vpop.f32.mrf.mxu0
      %v1406 = vadd.f32 %v1352, %v1405
      %1407 = vmatmul.bf16.gmra.mxu0 %v728
      %v1408 = vpop.f32.mrf.mxu0
      %v1409 = vadd.f32 %v1355, %v1408
      %v1410 = vpop.f32.mrf.mxu0
      %v1411 = vadd.f32 %v1357, %v1410
      %1412 = vmatmul.bf16.gmra.mxu0 %v738
      %v1413 = vpop.f32.mrf.mxu0
      %v1414 = vadd.f32 %v1360, %v1413
      %v1415 = vpop.f32.mrf.mxu0
      %v1416 = vadd.f32 %v1362, %v1415
      %1417 = vmatmul.bf16.gmra.mxu0 %v748
      %v1418 = vpop.f32.mrf.mxu0
      %v1419 = vadd.f32 %v1365, %v1418
      %v1420 = vpop.f32.mrf.mxu0
      %v1421 = vadd.f32 %v1367, %v1420
      %1422 = vmatmul.bf16.gmra.mxu0 %v758
      %v1423 = vpop.f32.mrf.mxu0
      %v1424 = vadd.f32 %v1370, %v1423
      %v1425 = vpop.f32.mrf.mxu0
      %v1426 = vadd.f32 %v1372, %v1425
      %1427 = vmatmul.bf16.gmra.mxu0 %v768
      %v1428 = vpop.f32.mrf.mxu0
      %v1429 = vadd.f32 %v1375, %v1428
      %v1430 = vpop.f32.mrf.mxu0
      %v1431 = vadd.f32 %v1377, %v1430
      %1432 = vdwg.mxu0
      %1433 = vmatpush.bf16.msra.mxu0 %v1171
      %1434 = vmatpush.bf16.msra.mxu0 %v1170
      %1435 = vmatpush.bf16.msra.mxu0 %v1169
      %1436 = vmatpush.bf16.msra.mxu0 %v1168
      %1437 = vmatpush.bf16.msra.mxu0 %v1167
      %1438 = vmatpush.bf16.msra.mxu0 %v1166
      %1439 = vmatpush.bf16.msra.mxu0 %v1165
      %1440 = vmatpush.bf16.msra.mxu0 %v1164
      %1441 = vmatmul.bf16.gmra.mxu0 %v689
      %v1442 = vpop.f32.mrf.mxu0
      %v1443 = vadd.f32 %v1389, %v1442
      %v1444 = vpop.f32.mrf.mxu0
      %v1445 = vadd.f32 %v1391, %v1444
      %1446 = vmatmul.bf16.gmra.mxu0 %v699
      %v1447 = vpop.f32.mrf.mxu0
      %v1448 = vadd.f32 %v1394, %v1447
      %v1449 = vpop.f32.mrf.mxu0
      %v1450 = vadd.f32 %v1396, %v1449
      %1451 = vmatmul.bf16.gmra.mxu0 %v709
      %v1452 = vpop.f32.mrf.mxu0
      %v1453 = vadd.f32 %v1399, %v1452
      %v1454 = vpop.f32.mrf.mxu0
      %v1455 = vadd.f32 %v1401, %v1454
      %1456 = vmatmul.bf16.gmra.mxu0 %v719
      %v1457 = vpop.f32.mrf.mxu0
      %v1458 = vadd.f32 %v1404, %v1457
      %v1459 = vpop.f32.mrf.mxu0
      %v1460 = vadd.f32 %v1406, %v1459
      %1461 = vmatmul.bf16.gmra.mxu0 %v729
      %v1462 = vpop.f32.mrf.mxu0
      %v1463 = vadd.f32 %v1409, %v1462
      %v1464 = vpop.f32.mrf.mxu0
      %v1465 = vadd.f32 %v1411, %v1464
      %1466 = vmatmul.bf16.gmra.mxu0 %v739
      %v1467 = vpop.f32.mrf.mxu0
      %v1468 = vadd.f32 %v1414, %v1467
      %v1469 = vpop.f32.mrf.mxu0
      %v1470 = vadd.f32 %v1416, %v1469
      %1471 = vmatmul.bf16.gmra.mxu0 %v749
      %v1472 = vpop.f32.mrf.mxu0
      %v1473 = vadd.f32 %v1419, %v1472
      %v1474 = vpop.f32.mrf.mxu0
      %v1475 = vadd.f32 %v1421, %v1474
      %1476 = vmatmul.bf16.gmra.mxu0 %v759
      %v1477 = vpop.f32.mrf.mxu0
      %v1478 = vadd.f32 %v1424, %v1477
      %v1479 = vpop.f32.mrf.mxu0
      %v1480 = vadd.f32 %v1426, %v1479
      %1481 = vmatmul.bf16.gmra.mxu0 %v769
      %v1482 = vpop.f32.mrf.mxu0
      %v1483 = vadd.f32 %v1429, %v1482
      %v1484 = vpop.f32.mrf.mxu0
      %v1485 = vadd.f32 %v1431, %v1484
      %1486 = vdwg.mxu0
      %1487 = vmatpush.bf16.msra.mxu0 %v1179
      %1488 = vmatpush.bf16.msra.mxu0 %v1178
      %1489 = vmatpush.bf16.msra.mxu0 %v1177
      %1490 = vmatpush.bf16.msra.mxu0 %v1176
      %1491 = vmatpush.bf16.msra.mxu0 %v1175
      %1492 = vmatpush.bf16.msra.mxu0 %v1174
      %1493 = vmatpush.bf16.msra.mxu0 %v1173
      %1494 = vmatpush.bf16.msra.mxu0 %v1172
      %1495 = vmatmul.bf16.gmra.mxu0 %v690
      %v1496 = vpop.f32.mrf.mxu0
      %v1497 = vadd.f32 %v1443, %v1496
      %v1498 = vpop.f32.mrf.mxu0
      %v1499 = vadd.f32 %v1445, %v1498
      %1500 = vmatmul.bf16.gmra.mxu0 %v700
      %v1501 = vpop.f32.mrf.mxu0
      %v1502 = vadd.f32 %v1448, %v1501
      %v1503 = vpop.f32.mrf.mxu0
      %v1504 = vadd.f32 %v1450, %v1503
      %1505 = vmatmul.bf16.gmra.mxu0 %v710
      %v1506 = vpop.f32.mrf.mxu0
      %v1507 = vadd.f32 %v1453, %v1506
      %v1508 = vpop.f32.mrf.mxu0
      %v1509 = vadd.f32 %v1455, %v1508
      %1510 = vmatmul.bf16.gmra.mxu0 %v720
      %v1511 = vpop.f32.mrf.mxu0
      %v1512 = vadd.f32 %v1458, %v1511
      %v1513 = vpop.f32.mrf.mxu0
      %v1514 = vadd.f32 %v1460, %v1513
      %1515 = vmatmul.bf16.gmra.mxu0 %v730
      %v1516 = vpop.f32.mrf.mxu0
      %v1517 = vadd.f32 %v1463, %v1516
      %v1518 = vpop.f32.mrf.mxu0
      %v1519 = vadd.f32 %v1465, %v1518
      %1520 = vmatmul.bf16.gmra.mxu0 %v740
      %v1521 = vpop.f32.mrf.mxu0
      %v1522 = vadd.f32 %v1468, %v1521
      %v1523 = vpop.f32.mrf.mxu0
      %v1524 = vadd.f32 %v1470, %v1523
      %1525 = vmatmul.bf16.gmra.mxu0 %v750
      %v1526 = vpop.f32.mrf.mxu0
      %v1527 = vadd.f32 %v1473, %v1526
      %v1528 = vpop.f32.mrf.mxu0
      %v1529 = vadd.f32 %v1475, %v1528
      %1530 = vmatmul.bf16.gmra.mxu0 %v760
      %v1531 = vpop.f32.mrf.mxu0
      %v1532 = vadd.f32 %v1478, %v1531
      %v1533 = vpop.f32.mrf.mxu0
      %v1534 = vadd.f32 %v1480, %v1533
      %1535 = vmatmul.bf16.gmra.mxu0 %v770
      %v1536 = vpop.f32.mrf.mxu0
      %v1537 = vadd.f32 %v1483, %v1536
      %v1538 = vpop.f32.mrf.mxu0
      %v1539 = vadd.f32 %v1485, %v1538
      %1540 = vdwg.mxu0
      %1541 = vmatpush.bf16.msra.mxu0 %v1187
      %1542 = vmatpush.bf16.msra.mxu0 %v1186
      %1543 = vmatpush.bf16.msra.mxu0 %v1185
      %1544 = vmatpush.bf16.msra.mxu0 %v1184
      %1545 = vmatpush.bf16.msra.mxu0 %v1183
      %1546 = vmatpush.bf16.msra.mxu0 %v1182
      %1547 = vmatpush.bf16.msra.mxu0 %v1181
      %1548 = vmatpush.bf16.msra.mxu0 %v1180
      %1549 = vmatmul.bf16.gmra.mxu0 %v691
      %v1550 = vpop.f32.mrf.mxu0
      %v1551 = vadd.f32 %v1497, %v1550
      %v1552 = vpop.f32.mrf.mxu0
      %v1553 = vadd.f32 %v1499, %v1552
      %1554 = vmatmul.bf16.gmra.mxu0 %v701
      %v1555 = vpop.f32.mrf.mxu0
      %v1556 = vadd.f32 %v1502, %v1555
      %v1557 = vpop.f32.mrf.mxu0
      %v1558 = vadd.f32 %v1504, %v1557
      %1559 = vmatmul.bf16.gmra.mxu0 %v711
      %v1560 = vpop.f32.mrf.mxu0
      %v1561 = vadd.f32 %v1507, %v1560
      %v1562 = vpop.f32.mrf.mxu0
      %v1563 = vadd.f32 %v1509, %v1562
      %1564 = vmatmul.bf16.gmra.mxu0 %v721
      %v1565 = vpop.f32.mrf.mxu0
      %v1566 = vadd.f32 %v1512, %v1565
      %v1567 = vpop.f32.mrf.mxu0
      %v1568 = vadd.f32 %v1514, %v1567
      %1569 = vmatmul.bf16.gmra.mxu0 %v731
      %v1570 = vpop.f32.mrf.mxu0
      %v1571 = vadd.f32 %v1517, %v1570
      %v1572 = vpop.f32.mrf.mxu0
      %v1573 = vadd.f32 %v1519, %v1572
      %1574 = vmatmul.bf16.gmra.mxu0 %v741
      %v1575 = vpop.f32.mrf.mxu0
      %v1576 = vadd.f32 %v1522, %v1575
      %v1577 = vpop.f32.mrf.mxu0
      %v1578 = vadd.f32 %v1524, %v1577
      %1579 = vmatmul.bf16.gmra.mxu0 %v751
      %v1580 = vpop.f32.mrf.mxu0
      %v1581 = vadd.f32 %v1527, %v1580
      %v1582 = vpop.f32.mrf.mxu0
      %v1583 = vadd.f32 %v1529, %v1582
      %1584 = vmatmul.bf16.gmra.mxu0 %v761
      %v1585 = vpop.f32.mrf.mxu0
      %v1586 = vadd.f32 %v1532, %v1585
      %v1587 = vpop.f32.mrf.mxu0
      %v1588 = vadd.f32 %v1534, %v1587
      %1589 = vmatmul.bf16.gmra.mxu0 %v771
      %v1590 = vpop.f32.mrf.mxu0
      %v1591 = vadd.f32 %v1537, %v1590
      %v1592 = vpop.f32.mrf.mxu0
      %v1593 = vadd.f32 %v1539, %v1592
      %1594 = vdwg.mxu0
      %1595 = vmatpush.bf16.msra.mxu0 %v1195
      %1596 = vmatpush.bf16.msra.mxu0 %v1194
      %1597 = vmatpush.bf16.msra.mxu0 %v1193
      %1598 = vmatpush.bf16.msra.mxu0 %v1192
      %1599 = vmatpush.bf16.msra.mxu0 %v1191
      %1600 = vmatpush.bf16.msra.mxu0 %v1190
      %1601 = vmatpush.bf16.msra.mxu0 %v1189
      %1602 = vmatpush.bf16.msra.mxu0 %v1188
      %1603 = vmatmul.bf16.gmra.mxu0 %v692
      %v1604 = vpop.f32.mrf.mxu0
      %v1605 = vadd.f32 %v1551, %v1604
      %v1606 = vpop.f32.mrf.mxu0
      %v1607 = vadd.f32 %v1553, %v1606
      %1608 = vmatmul.bf16.gmra.mxu0 %v702
      %v1609 = vpop.f32.mrf.mxu0
      %v1610 = vadd.f32 %v1556, %v1609
      %v1611 = vpop.f32.mrf.mxu0
      %v1612 = vadd.f32 %v1558, %v1611
      %1613 = vmatmul.bf16.gmra.mxu0 %v712
      %v1614 = vpop.f32.mrf.mxu0
      %v1615 = vadd.f32 %v1561, %v1614
      %v1616 = vpop.f32.mrf.mxu0
      %v1617 = vadd.f32 %v1563, %v1616
      %1618 = vmatmul.bf16.gmra.mxu0 %v722
      %v1619 = vpop.f32.mrf.mxu0
      %v1620 = vadd.f32 %v1566, %v1619
      %v1621 = vpop.f32.mrf.mxu0
      %v1622 = vadd.f32 %v1568, %v1621
      %1623 = vmatmul.bf16.gmra.mxu0 %v732
      %v1624 = vpop.f32.mrf.mxu0
      %v1625 = vadd.f32 %v1571, %v1624
      %v1626 = vpop.f32.mrf.mxu0
      %v1627 = vadd.f32 %v1573, %v1626
      %1628 = vmatmul.bf16.gmra.mxu0 %v742
      %v1629 = vpop.f32.mrf.mxu0
      %v1630 = vadd.f32 %v1576, %v1629
      %v1631 = vpop.f32.mrf.mxu0
      %v1632 = vadd.f32 %v1578, %v1631
      %1633 = vmatmul.bf16.gmra.mxu0 %v752
      %v1634 = vpop.f32.mrf.mxu0
      %v1635 = vadd.f32 %v1581, %v1634
      %v1636 = vpop.f32.mrf.mxu0
      %v1637 = vadd.f32 %v1583, %v1636
      %1638 = vmatmul.bf16.gmra.mxu0 %v762
      %v1639 = vpop.f32.mrf.mxu0
      %v1640 = vadd.f32 %v1586, %v1639
      %v1641 = vpop.f32.mrf.mxu0
      %v1642 = vadd.f32 %v1588, %v1641
      %1643 = vmatmul.bf16.gmra.mxu0 %v772
      %v1644 = vpop.f32.mrf.mxu0
      %v1645 = vadd.f32 %v1591, %v1644
      %v1646 = vpop.f32.mrf.mxu0
      %v1647 = vadd.f32 %v1593, %v1646
      %1648 = vdwg.mxu0
      %1649 = vmatpush.bf16.msra.mxu0 %v1203
      %1650 = vmatpush.bf16.msra.mxu0 %v1202
      %1651 = vmatpush.bf16.msra.mxu0 %v1201
      %1652 = vmatpush.bf16.msra.mxu0 %v1200
      %1653 = vmatpush.bf16.msra.mxu0 %v1199
      %1654 = vmatpush.bf16.msra.mxu0 %v1198
      %1655 = vmatpush.bf16.msra.mxu0 %v1197
      %1656 = vmatpush.bf16.msra.mxu0 %v1196
      %1657 = vmatmul.bf16.gmra.mxu0 %v693
      %v1658 = vpop.f32.mrf.mxu0
      %v1659 = vadd.f32 %v1605, %v1658
      %v1660 = vpop.f32.mrf.mxu0
      %v1661 = vadd.f32 %v1607, %v1660
      %1662 = vmatmul.bf16.gmra.mxu0 %v703
      %v1663 = vpop.f32.mrf.mxu0
      %v1664 = vadd.f32 %v1610, %v1663
      %v1665 = vpop.f32.mrf.mxu0
      %v1666 = vadd.f32 %v1612, %v1665
      %1667 = vmatmul.bf16.gmra.mxu0 %v713
      %v1668 = vpop.f32.mrf.mxu0
      %v1669 = vadd.f32 %v1615, %v1668
      %v1670 = vpop.f32.mrf.mxu0
      %v1671 = vadd.f32 %v1617, %v1670
      %1672 = vmatmul.bf16.gmra.mxu0 %v723
      %v1673 = vpop.f32.mrf.mxu0
      %v1674 = vadd.f32 %v1620, %v1673
      %v1675 = vpop.f32.mrf.mxu0
      %v1676 = vadd.f32 %v1622, %v1675
      %1677 = vmatmul.bf16.gmra.mxu0 %v733
      %v1678 = vpop.f32.mrf.mxu0
      %v1679 = vadd.f32 %v1625, %v1678
      %v1680 = vpop.f32.mrf.mxu0
      %v1681 = vadd.f32 %v1627, %v1680
      %1682 = vmatmul.bf16.gmra.mxu0 %v743
      %v1683 = vpop.f32.mrf.mxu0
      %v1684 = vadd.f32 %v1630, %v1683
      %v1685 = vpop.f32.mrf.mxu0
      %v1686 = vadd.f32 %v1632, %v1685
      %1687 = vmatmul.bf16.gmra.mxu0 %v753
      %v1688 = vpop.f32.mrf.mxu0
      %v1689 = vadd.f32 %v1635, %v1688
      %v1690 = vpop.f32.mrf.mxu0
      %v1691 = vadd.f32 %v1637, %v1690
      %1692 = vmatmul.bf16.gmra.mxu0 %v763
      %v1693 = vpop.f32.mrf.mxu0
      %v1694 = vadd.f32 %v1640, %v1693
      %v1695 = vpop.f32.mrf.mxu0
      %v1696 = vadd.f32 %v1642, %v1695
      %1697 = vmatmul.bf16.gmra.mxu0 %v773
      %v1698 = vpop.f32.mrf.mxu0
      %v1699 = vadd.f32 %v1645, %v1698
      %v1700 = vpop.f32.mrf.mxu0
      %v1701 = vadd.f32 %v1647, %v1700
      %1702 = vdwg.mxu0
      %1703 = vmatpush.bf16.msra.mxu0 %v1211
      %1704 = vmatpush.bf16.msra.mxu0 %v1210
      %1705 = vmatpush.bf16.msra.mxu0 %v1209
      %1706 = vmatpush.bf16.msra.mxu0 %v1208
      %1707 = vmatpush.bf16.msra.mxu0 %v1207
      %1708 = vmatpush.bf16.msra.mxu0 %v1206
      %1709 = vmatpush.bf16.msra.mxu0 %v1205
      %1710 = vmatpush.bf16.msra.mxu0 %v1204
      %1711 = vmatmul.bf16.gmra.mxu0 %v694
      %v1712 = vpop.f32.mrf.mxu0
      %v1713 = vadd.f32 %v1659, %v1712
      %v1714 = vpop.f32.mrf.mxu0
      %v1715 = vadd.f32 %v1661, %v1714
      %1716 = vmatmul.bf16.gmra.mxu0 %v704
      %v1717 = vpop.f32.mrf.mxu0
      %v1718 = vadd.f32 %v1664, %v1717
      %v1719 = vpop.f32.mrf.mxu0
      %v1720 = vadd.f32 %v1666, %v1719
      %1721 = vmatmul.bf16.gmra.mxu0 %v714
      %v1722 = vpop.f32.mrf.mxu0
      %v1723 = vadd.f32 %v1669, %v1722
      %v1724 = vpop.f32.mrf.mxu0
      %v1725 = vadd.f32 %v1671, %v1724
      %1726 = vmatmul.bf16.gmra.mxu0 %v724
      %v1727 = vpop.f32.mrf.mxu0
      %v1728 = vadd.f32 %v1674, %v1727
      %v1729 = vpop.f32.mrf.mxu0
      %v1730 = vadd.f32 %v1676, %v1729
      %1731 = vmatmul.bf16.gmra.mxu0 %v734
      %v1732 = vpop.f32.mrf.mxu0
      %v1733 = vadd.f32 %v1679, %v1732
      %v1734 = vpop.f32.mrf.mxu0
      %v1735 = vadd.f32 %v1681, %v1734
      %1736 = vmatmul.bf16.gmra.mxu0 %v744
      %v1737 = vpop.f32.mrf.mxu0
      %v1738 = vadd.f32 %v1684, %v1737
      %v1739 = vpop.f32.mrf.mxu0
      %v1740 = vadd.f32 %v1686, %v1739
      %1741 = vmatmul.bf16.gmra.mxu0 %v754
      %v1742 = vpop.f32.mrf.mxu0
      %v1743 = vadd.f32 %v1689, %v1742
      %v1744 = vpop.f32.mrf.mxu0
      %v1745 = vadd.f32 %v1691, %v1744
      %1746 = vmatmul.bf16.gmra.mxu0 %v764
      %v1747 = vpop.f32.mrf.mxu0
      %v1748 = vadd.f32 %v1694, %v1747
      %v1749 = vpop.f32.mrf.mxu0
      %v1750 = vadd.f32 %v1696, %v1749
      %1751 = vmatmul.bf16.gmra.mxu0 %v774
      %v1752 = vpop.f32.mrf.mxu0
      %v1753 = vadd.f32 %v1699, %v1752
      %v1754 = vpop.f32.mrf.mxu0
      %v1755 = vadd.f32 %v1701, %v1754
      %1756 = vdwg.mxu0
      %1757 = vmatpush.bf16.msra.mxu0 %v1219
      %1758 = vmatpush.bf16.msra.mxu0 %v1218
      %1759 = vmatpush.bf16.msra.mxu0 %v1217
      %1760 = vmatpush.bf16.msra.mxu0 %v1216
      %1761 = vmatpush.bf16.msra.mxu0 %v1215
      %1762 = vmatpush.bf16.msra.mxu0 %v1214
      %1763 = vmatpush.bf16.msra.mxu0 %v1213
      %1764 = vmatpush.bf16.msra.mxu0 %v1212
      %1765 = vmatmul.bf16.gmra.mxu0 %v695
      %v1766 = vpop.f32.mrf.mxu0
      %v1767 = vadd.f32 %v1713, %v1766
      %v1768 = vpop.f32.mrf.mxu0
      %v1769 = vadd.f32 %v1715, %v1768
      %1770 = vmatmul.bf16.gmra.mxu0 %v705
      %v1771 = vpop.f32.mrf.mxu0
      %v1772 = vadd.f32 %v1718, %v1771
      %v1773 = vpop.f32.mrf.mxu0
      %v1774 = vadd.f32 %v1720, %v1773
      %1775 = vmatmul.bf16.gmra.mxu0 %v715
      %v1776 = vpop.f32.mrf.mxu0
      %v1777 = vadd.f32 %v1723, %v1776
      %v1778 = vpop.f32.mrf.mxu0
      %v1779 = vadd.f32 %v1725, %v1778
      %1780 = vmatmul.bf16.gmra.mxu0 %v725
      %v1781 = vpop.f32.mrf.mxu0
      %v1782 = vadd.f32 %v1728, %v1781
      %v1783 = vpop.f32.mrf.mxu0
      %v1784 = vadd.f32 %v1730, %v1783
      %1785 = vmatmul.bf16.gmra.mxu0 %v735
      %v1786 = vpop.f32.mrf.mxu0
      %v1787 = vadd.f32 %v1733, %v1786
      %v1788 = vpop.f32.mrf.mxu0
      %v1789 = vadd.f32 %v1735, %v1788
      %1790 = vmatmul.bf16.gmra.mxu0 %v745
      %v1791 = vpop.f32.mrf.mxu0
      %v1792 = vadd.f32 %v1738, %v1791
      %v1793 = vpop.f32.mrf.mxu0
      %v1794 = vadd.f32 %v1740, %v1793
      %1795 = vmatmul.bf16.gmra.mxu0 %v755
      %v1796 = vpop.f32.mrf.mxu0
      %v1797 = vadd.f32 %v1743, %v1796
      %v1798 = vpop.f32.mrf.mxu0
      %v1799 = vadd.f32 %v1745, %v1798
      %1800 = vmatmul.bf16.gmra.mxu0 %v765
      %v1801 = vpop.f32.mrf.mxu0
      %v1802 = vadd.f32 %v1748, %v1801
      %v1803 = vpop.f32.mrf.mxu0
      %v1804 = vadd.f32 %v1750, %v1803
      %1805 = vmatmul.bf16.gmra.mxu0 %v775
      %v1806 = vpop.f32.mrf.mxu0
      %v1807 = vadd.f32 %v1753, %v1806
      %v1808 = vpop.f32.mrf.mxu0
      %v1809 = vadd.f32 %v1755, %v1808
      %1810 = vdwg.mxu0
      %1811 = vmatpush.bf16.msra.mxu0 0
      %1812 = vmatpush.bf16.msra.mxu0 0
      %1813 = vmatpush.bf16.msra.mxu0 0
      %1814 = vmatpush.bf16.msra.mxu0 0
      %1815 = vmatpush.bf16.msra.mxu0 0
      %1816 = vmatpush.bf16.msra.mxu0 0
      %1817 = vmatpush.bf16.msra.mxu0 0
      %1818 = vmatpush.bf16.msra.mxu0 %v1323
      %1819 = vmatmul.bf16.gmra.mxu0 %v1295
      %v1820 = vpop.f32.mrf.mxu0
      %v1821 = vadd.f32 %v1767, %v1820
      %v1822 = vpop.f32.mrf.mxu0
      %v1823 = vadd.f32 %v1769, %v1822
      %1824 = vmatmul.bf16.gmra.mxu0 %v1298
      %v1825 = vpop.f32.mrf.mxu0
      %v1826 = vadd.f32 %v1772, %v1825
      %v1827 = vpop.f32.mrf.mxu0
      %v1828 = vadd.f32 %v1774, %v1827
      %1829 = vmatmul.bf16.gmra.mxu0 %v1301
      %v1830 = vpop.f32.mrf.mxu0
      %v1831 = vadd.f32 %v1777, %v1830
      %v1832 = vpop.f32.mrf.mxu0
      %v1833 = vadd.f32 %v1779, %v1832
      %1834 = vmatmul.bf16.gmra.mxu0 %v1304
      %v1835 = vpop.f32.mrf.mxu0
      %v1836 = vadd.f32 %v1782, %v1835
      %v1837 = vpop.f32.mrf.mxu0
      %v1838 = vadd.f32 %v1784, %v1837
      %1839 = vmatmul.bf16.gmra.mxu0 %v1307
      %v1840 = vpop.f32.mrf.mxu0
      %v1841 = vadd.f32 %v1787, %v1840
      %v1842 = vpop.f32.mrf.mxu0
      %v1843 = vadd.f32 %v1789, %v1842
      %1844 = vmatmul.bf16.gmra.mxu0 %v1310
      %v1845 = vpop.f32.mrf.mxu0
      %v1846 = vadd.f32 %v1792, %v1845
      %v1847 = vpop.f32.mrf.mxu0
      %v1848 = vadd.f32 %v1794, %v1847
      %1849 = vmatmul.bf16.gmra.mxu0 %v1313
      %v1850 = vpop.f32.mrf.mxu0
      %v1851 = vadd.f32 %v1797, %v1850
      %v1852 = vpop.f32.mrf.mxu0
      %v1853 = vadd.f32 %v1799, %v1852
      %1854 = vmatmul.bf16.gmra.mxu0 %v1316
      %v1855 = vpop.f32.mrf.mxu0
      %v1856 = vadd.f32 %v1802, %v1855
      %v1857 = vpop.f32.mrf.mxu0
      %v1858 = vadd.f32 %v1804, %v1857
      %1859 = vmatmul.bf16.gmra.mxu0 %v1319
      %v1860 = vpop.f32.mrf.mxu0
      %v1861 = vadd.f32 %v1807, %v1860
      %v1862 = vpop.f32.mrf.mxu0
      %v1863 = vadd.f32 %v1809, %v1862
      %1864 = vdwg.mxu0
      %v1865 = vmax.f32 %v1821, 0.0
      %v1866 = vmax.f32 %v1823, 0.0
      %v1867 = vmax.f32 %v1826, 0.0
      %v1868 = vmax.f32 %v1828, 0.0
      %v1869 = vmax.f32 %v1831, 0.0
      %v1870 = vmax.f32 %v1833, 0.0
      %v1871 = vmax.f32 %v1836, 0.0
      %v1872 = vmax.f32 %v1838, 0.0
      %v1873 = vmax.f32 %v1841, 0.0
      %v1874 = vmax.f32 %v1843, 0.0
      %v1875 = vmax.f32 %v1846, 0.0
      %v1876 = vmax.f32 %v1848, 0.0
      %v1877 = vmax.f32 %v1851, 0.0
      %v1878 = vmax.f32 %v1853, 0.0
      %v1879 = vmax.f32 %v1856, 0.0
      %v1880 = vmax.f32 %v1858, 0.0
      %v1881 = vmax.f32 %v1861, 0.0
      %v1882 = vmax.f32 %v1863, 0.0
      %1883 = vst [vmem:[%s175] sm:$0xff] %v1865
      %1884 = vst [vmem:[%s175 + $0x8] sm:$0xff] %v1866
      %1885 = vst [vmem:[%s175 + $0x10] sm:$0xff] %v1867
      %1886 = vst [vmem:[%s175 + $0x18] sm:$0xff] %v1868
      %1887 = vst [vmem:[%s175 + $0x20] sm:$0xff] %v1869
      %1888 = vst [vmem:[%s175 + $0x28] sm:$0xff] %v1870
      %1889 = vst [vmem:[%s175 + $0x30] sm:$0xff] %v1871
      %1890 = vst [vmem:[%s175 + $0x38] sm:$0xff] %v1872
      %1891 = vst [vmem:[%s175 + $0x40] sm:$0xff] %v1873
      %1892 = vst [vmem:[%s175 + $0x48] sm:$0xff] %v1874
      %1893 = vst [vmem:[%s175 + $0x50] sm:$0xff] %v1875
      %1894 = vst [vmem:[%s175 + $0x58] sm:$0xff] %v1876
      %1895 = vst [vmem:[%s175 + $0x60] sm:$0xff] %v1877
      %1896 = vst [vmem:[%s175 + $0x68] sm:$0xff] %v1878
      %1897 = vst [vmem:[%s175 + $0x70] sm:$0xff] %v1879
      %1898 = vst [vmem:[%s175 + $0x78] sm:$0xff] %v1880
      %1899 = vst [vmem:[%s175 + $0x80] sm:$0xff] %v1881
      %1900 = vst [vmem:[%s175 + $0x88] sm:$0xff] %v1882
      %s1901 = smul.u32 18, %s14
      %p1902 = scmp.lt.s32.totalorder %s1901, 35
      %s1903 = scalar_select %p1902, %s1901, 35
      %s1904 = smul.addr %s1903, 8
      %s1905 = scalar_lea.vmem %s3, %s1904
      // Predicated region
      $region33: #{resida_forward.3} parent=31 // pred_check
        %p1906 = pneg %p100
      $region34: #{resida_forward.3} parent=31 // pred_check_branch
        %1908 = sbr.rel (%p1906) target = $region36
      $region35: #{resida_forward.3} parent=31 // pred_region
        %s1909 = smul.u32 18, %s14
      $region36: #{resida_forward.3} parent=31 // pred_fallthru
        _
    $region32: #{resida_forward.3} parent=5 // pred_fallthru
      _
    %p1910 = scmp.le.s32.totalorder 2, %s9
    // Predicated region
    $region37: #{resida_forward.3} parent=5 // pred_check
      %p1911 = pneg %p1910
    $region38: #{resida_forward.3} parent=5 // pred_check_branch
      %1913 = sbr.rel (%p1911) target = $region40
    $region39: #{resida_forward.3} parent=5 // pred_region
      %s1914 = ssub.s32 %s9, 2
      // Predicated region
      $region41: #{resida_forward.3} parent=39 // pred_check
        %p1915 = pneg %p106
      $region42: #{resida_forward.3} parent=39 // pred_check_branch
        %1917 = sbr.rel (%p1915) target = $region44
      $region43: #{resida_forward.3} parent=39 // pred_region
        %s1918 = smul.u32 18, %s15
        %p1919 = scmp.lt.s32.totalorder %s1918, 35
        %s1920 = scalar_select %p1919, %s1918, 35
        %s1921 = smul.addr %s1920, 8
        %s1922 = scalar_lea.vmem %s3, %s1921
      $region44: #{resida_forward.3} parent=39 // pred_fallthru
        _
    $region40: #{resida_forward.3} parent=5 // pred_fallthru
      _
  $region6: #{resida_forward.3} parent=0 // loop_footer
    %s13 = sadd.s32 1, %s9
  $region7: #{resida_forward.3} parent=0 // loop_footer_branch
    %8 = sbr.rel target = $region3
  $region8: #{resida_forward.3} parent=0 // loop_exit
    _

</llo_original>
